<compile_context>
chip_gen: v5e
topology: v5e:2x2
jax: 0.10.0
libtpu: 0.0.40
codegen_flags: <defaults>
</compile_context>

<pallas_src>
import functools

import jax
import jax.numpy as jnp
from jax.experimental import pallas as pl
from jax.experimental.pallas import tpu as pltpu

LANE = 128
ROW_ALIGN = 256          # row-tile granularity (bf16 sublane pack & lane-dense head)
_EPS = 1e-5              # nn.BatchNorm2d default
_SLOPE = 0.2             # LeakyReLU negative slope


def _round_up(x, m):
    return (x + m - 1) // m * m


# ----------------------------------------------------------------------------
# Kernel bodies
# ----------------------------------------------------------------------------
def _hidden_tile(x_ref, w1_ref, b1_ref, w2_ref, cin):
    """conv1(+bias) + LeakyReLU + conv2 matmul for the current row tile.

    conv1 has a tiny contraction dim (input_nc), so it runs on the VPU as a sum
    of rank-1 (column x row) broadcasts in f32; conv2 (K = C1p = 128) uses the
    MXU.  Everything stays in vregs/VMEM -- nothing here touches HBM.
    """
    xt = x_ref[...].astype(jnp.float32)                    # (TM, cin)
    h = b1_ref[...]                                        # (1, C1p), broadcasts up
    for c in range(cin):                                   # cin is tiny & static
        h = h + xt[:, c:c + 1] * w1_ref[c:c + 1, :]        # (TM,1)*(1,C1p)
    h = jnp.where(h > 0, h, _SLOPE * h)                    # LeakyReLU(0.2)
    # conv2 (bias=False); BatchNorm is applied later with global stats.
    return jnp.dot(h.astype(jnp.bfloat16), w2_ref[...],
                   preferred_element_type=jnp.float32)     # (TM, C2p) f32


def _stats_kernel(x_ref, w1_ref, b1_ref, w2_ref, part_ref, *,
                  cin, mask_last, valid_rows_last):
    """Pass 1: per-tile BatchNorm partial sums (sum, sum-of-squares) only."""
    z = _hidden_tile(x_ref, w1_ref, b1_ref, w2_ref, cin)

    def write(zm):
        part_ref[0, 0:1, :] = jnp.sum(zm, axis=0, keepdims=True)
        part_ref[0, 1:2, :] = jnp.sum(zm * zm, axis=0, keepdims=True)

    if not mask_last:                                      # tiling divides P exactly
        write(z)
    else:
        is_last = pl.program_id(0) == pl.num_programs(0) - 1

        @pl.when(jnp.logical_not(is_last))
        def _():
            write(z)

        @pl.when(is_last)                                  # mask padded rows
        def _():
            row = jax.lax.broadcasted_iota(jnp.int32, (z.shape[0], 1), 0)
            write(z * (row < valid_rows_last).astype(jnp.float32))


def _head_kernel(x_ref, w1_ref, b1_ref, w2_ref, scale_ref, shift_ref, w3_ref,
                 o_ref, *, cin):
    """Pass 2: recompute hidden, apply global BN + LeakyReLU, 1-channel head."""
    z = _hidden_tile(x_ref, w1_ref, b1_ref, w2_ref, cin)
    y = z * scale_ref[...] + shift_ref[...]                # BatchNorm (global stats)
    y = jnp.where(y > 0, y, _SLOPE * y)                    # LeakyReLU(0.2)
    # Head as w3 @ y^T -> lane-dense (1, TM) row per tile.  Only row 0 of w3 is
    # real; rows 1..7 are zero padding to keep the lhs 8-sublane aligned.
    ht = jax.lax.dot_general(w3_ref[...], y.astype(jnp.bfloat16),
                             (((1,), (1,)), ((), ())),
                             preferred_element_type=jnp.float32)   # (8, TM)
    o_ref[0] = ht[0:1, :]


# ----------------------------------------------------------------------------
# Parameters (PyTorch-shaped) and forward wrapper
# ----------------------------------------------------------------------------
def build_pixel_discriminator(key, input_nc, ndf=64):
    """Conv weights in PyTorch layout (Cout, Cin, 1, 1); BN affine params."""
    c2 = ndf * 2
    k1, kb1, k2, k3 = jax.random.split(key, 4)
    return dict(
        w1=0.05 * jax.random.normal(k1, (ndf, input_nc, 1, 1), jnp.float32),
        b1=0.05 * jax.random.normal(kb1, (ndf,), jnp.float32),
        # norm_layer == BatchNorm2d -> use_bias=False for conv2 / conv3
        w2=0.05 * jax.random.normal(k2, (c2, ndf, 1, 1), jnp.float32),
        gamma=jnp.ones((c2,), jnp.float32),
        beta=jnp.zeros((c2,), jnp.float32),
        w3=0.05 * jax.random.normal(k3, (1, c2, 1, 1), jnp.float32),
    )


def pixel_discriminator_forward(x_nchw, params, *, tile_rows=1024,
                                use_sigmoid=False):
    N, cin, H, W = x_nchw.shape
    ndf = params["w1"].shape[0]
    c2 = params["w2"].shape[0]
    P = N * H * W

    # Hidden channel dims live only in VMEM/vregs -> pad them to 128 lanes for
    # clean MXU shapes (zero-padded weights keep padded lanes exactly 0).
    c1p = _round_up(ndf, LANE)
    c2p = _round_up(c2, LANE)

    # Row tiling: TM multiple of 256; on v7x keep ntiles >= ~8 for real inputs
    # so the ("parallel",) grid axis can shard across both TensorCores.
    tm = _round_up(min(tile_rows, _round_up(P, ROW_ALIGN)), ROW_ALIGN)
    p_pad = _round_up(P, tm)
    ntiles = p_pad // tm
    mask_last = p_pad != P
    valid_rows_last = P - (ntiles - 1) * tm

    # NCHW -> (P, Cin) bf16, channels on the (tiny, unpadded) lane axis.  This
    # is the only staged copy of x (~2*Cin bytes/pixel of HBM).
    x = jnp.transpose(x_nchw, (0, 2, 3, 1)).reshape(P, cin).astype(jnp.bfloat16)
    if mask_last:
        x = jnp.pad(x, ((0, p_pad - P), (0, 0)))

    # Weights: tiny, resident across the grid (index_map -> (0, 0)).
    w1 = jnp.pad(params["w1"][:, :, 0, 0].T,
                 ((0, 0), (0, c1p - ndf))).astype(jnp.float32)          # (cin, C1p)
    b1 = jnp.pad(params["b1"], (0, c1p - ndf)).reshape(1, c1p).astype(jnp.float32)
    w2 = jnp.pad(params["w2"][:, :, 0, 0].T,
                 ((0, c1p - ndf), (0, c2p - c2))).astype(jnp.bfloat16)  # (C1p, C2p)
    w3 = jnp.pad(params["w3"][:, :, 0, 0],
                 ((0, 7), (0, c2p - c2))).astype(jnp.bfloat16)          # (8, C2p)
    gamma = jnp.pad(params["gamma"], (0, c2p - c2))   # padded lanes -> scale = 0
    beta = jnp.pad(params["beta"], (0, c2p - c2))

    cparams = pltpu.CompilerParams(
        dimension_semantics=("parallel",),
        vmem_limit_bytes=32 * 1024 * 1024,
    )
    x_spec = pl.BlockSpec((tm, cin), lambda i: (i, 0))
    w_specs = [
        pl.BlockSpec((cin, c1p), lambda i: (0, 0)),
        pl.BlockSpec((1, c1p), lambda i: (0, 0)),
        pl.BlockSpec((c1p, c2p), lambda i: (0, 0)),
    ]

    # ---- pass 1: per-tile BN partial sums (no activations ever hit HBM) -----
    partials = pl.pallas_call(
        functools.partial(_stats_kernel, cin=cin, mask_last=mask_last,
                          valid_rows_last=valid_rows_last),
        out_shape=jax.ShapeDtypeStruct((ntiles, 2, c2p), jnp.float32),
        grid=(ntiles,),
        in_specs=[x_spec] + w_specs,
        out_specs=pl.BlockSpec((1, 2, c2p), lambda i: (i, 0, 0)),
        compiler_params=cparams,
    )(x, w1, b1, w2)

    # ---- global BatchNorm stats (training mode: biased variance over N*H*W) -
    # TODO(synk): for extremely large P a shifted/Welford reduction of the
    # per-tile partials would be numerically safer than E[z^2] - mean^2.
    s = jnp.sum(partials[:, 0, :], axis=0)
    sq = jnp.sum(partials[:, 1, :], axis=0)
    mean = s / P
    var = jnp.maximum(sq / P - mean * mean, 0.0)
    scale = (gamma * jax.lax.rsqrt(var + _EPS)).reshape(1, c2p).astype(jnp.float32)
    shift = (beta - mean * scale[0]).reshape(1, c2p).astype(jnp.float32)

    # ---- pass 2: recompute hidden, BN + LeakyReLU + head -> (ntiles, 1, TM) --
    out = pl.pallas_call(
        functools.partial(_head_kernel, cin=cin),
        out_shape=jax.ShapeDtypeStruct((ntiles, 1, tm), jnp.float32),
        grid=(ntiles,),
        in_specs=[x_spec] + w_specs + [
            pl.BlockSpec((1, c2p), lambda i: (0, 0)),
            pl.BlockSpec((1, c2p), lambda i: (0, 0)),
            pl.BlockSpec((8, c2p), lambda i: (0, 0)),
        ],
        out_specs=pl.BlockSpec((1, 1, tm), lambda i: (i, 0, 0)),
        compiler_params=cparams,
    )(x, w1, b1, w2, scale, shift, w3)

    y = out.reshape(p_pad)[:P].reshape(N, H, W)[:, None, :, :]   # (N, 1, H, W)
    if use_sigmoid:
        y = jax.nn.sigmoid(y)
    return y


# ----------------------------------------------------------------------------
# Pure-JAX f32 reference (PyTorch semantics, BatchNorm in training mode)
# ----------------------------------------------------------------------------
def _reference_forward(x_nchw, params):
    w1 = params["w1"][:, :, 0, 0]
    h = jnp.einsum("nchw,oc->nohw", x_nchw, w1) + params["b1"][None, :, None, None]
    h = jnp.where(h > 0, h, _SLOPE * h)
    z = jnp.einsum("nchw,oc->nohw", h, params["w2"][:, :, 0, 0])
    mean = jnp.mean(z, axis=(0, 2, 3), keepdims=True)
    var = jnp.var(z, axis=(0, 2, 3), keepdims=True)       # biased, like BN training
    y = (z - mean) * jax.lax.rsqrt(var + _EPS)
    y = y * params["gamma"][None, :, None, None] + params["beta"][None, :, None, None]
    y = jnp.where(y > 0, y, _SLOPE * y)
    return jnp.einsum("nchw,oc->nohw", y, params["w3"][:, :, 0, 0])


# ----------------------------------------------------------------------------
if __name__ == "__main__":
    key = jax.random.PRNGKey(0)
    key, kx = jax.random.split(key)

    # Small deterministic example: batch=2, input_nc=4, 16x16 spatial, ndf=8.
    N, INPUT_NC, H, W = 2, 4, 16, 16
    NDF = 8

    x = jax.random.normal(kx, (N, INPUT_NC, H, W), jnp.float32)
    params = build_pixel_discriminator(key, INPUT_NC, ndf=NDF)

    out = pixel_discriminator_forward(x, params)
    out = jax.block_until_ready(out)

    assert out.shape == (N, 1, H, W), out.shape
    assert bool(jnp.all(jnp.isfinite(out)))

    ref = _reference_forward(x, params)
    max_err = float(jnp.max(jnp.abs(out - ref)))
    assert max_err < 5e-2, f"max abs error vs f32 reference: {max_err}"

    print("KERNEL_OK")
</pallas_src>

<mosaic_0001>
module attributes {stable_mosaic.version = 11 : i64} {
  func.func @_stats_kernel(%arg0: i32, %arg1: memref<512x4xbf16, #tpu.memory_space<vmem>>, %arg2: memref<4x128xf32, #tpu.memory_space<vmem>>, %arg3: memref<1x128xf32, #tpu.memory_space<vmem>>, %arg4: memref<128x128xbf16, #tpu.memory_space<vmem>>, %arg5: memref<1x2x128xf32, #tpu.memory_space<vmem>>) attributes {dimension_semantics = [#tpu.dimension_semantics<parallel>], iteration_bounds = array<i64: 1>, scalar_prefetch = 0 : i64, scratch_operands = 0 : i64, tpu.core_type = #tpu.core_type<tc>, window_params = [{transform_indices = @transform_0, window_bounds = array<i64: 512, 4>}, {pipeline_mode = #tpu.pipeline_mode<synchronous>, transform_indices = @transform_1, window_bounds = array<i64: 4, 128>}, {pipeline_mode = #tpu.pipeline_mode<synchronous>, transform_indices = @transform_2, window_bounds = array<i64: 1, 128>}, {pipeline_mode = #tpu.pipeline_mode<synchronous>, transform_indices = @transform_3, window_bounds = array<i64: 128, 128>}, {transform_indices = @transform_4, window_bounds = array<i64: 1, 2, 128>}]} {
    %c0 = arith.constant 0 : index
    %c0_0 = arith.constant 0 : index
    %0 = vector.load %arg1[%c0, %c0_0] : memref<512x4xbf16, #tpu.memory_space<vmem>>, vector<512x4xbf16>
    %1 = arith.extf %0 : vector<512x4xbf16> to vector<512x4xf32>
    %c0_1 = arith.constant 0 : index
    %c0_2 = arith.constant 0 : index
    %2 = vector.load %arg3[%c0_1, %c0_2] : memref<1x128xf32, #tpu.memory_space<vmem>>, vector<1x128xf32>
    %3 = vector.extract_strided_slice %1 {offsets = [0, 0], sizes = [512, 1], strides = [1, 1]} : vector<512x4xf32> to vector<512x1xf32>
    %c0_3 = arith.constant 0 : index
    %c0_4 = arith.constant 0 : index
    %4 = vector.load %arg2[%c0_3, %c0_4] : memref<4x128xf32, #tpu.memory_space<vmem>>, vector<1x128xf32>
    %5 = vector.broadcast %3 : vector<512x1xf32> to vector<512x128xf32>
    %6 = vector.broadcast %4 : vector<1x128xf32> to vector<512x128xf32>
    %7 = arith.mulf %5, %6 : vector<512x128xf32>
    %8 = vector.broadcast %2 : vector<1x128xf32> to vector<512x128xf32>
    %9 = arith.addf %8, %7 : vector<512x128xf32>
    %10 = vector.extract_strided_slice %1 {offsets = [0, 1], sizes = [512, 1], strides = [1, 1]} : vector<512x4xf32> to vector<512x1xf32>
    %c1 = arith.constant 1 : index
    %c0_5 = arith.constant 0 : index
    %11 = vector.load %arg2[%c1, %c0_5] : memref<4x128xf32, #tpu.memory_space<vmem>>, vector<1x128xf32>
    %12 = vector.broadcast %10 : vector<512x1xf32> to vector<512x128xf32>
    %13 = vector.broadcast %11 : vector<1x128xf32> to vector<512x128xf32>
    %14 = arith.mulf %12, %13 : vector<512x128xf32>
    %15 = arith.addf %9, %14 : vector<512x128xf32>
    %16 = vector.extract_strided_slice %1 {offsets = [0, 2], sizes = [512, 1], strides = [1, 1]} : vector<512x4xf32> to vector<512x1xf32>
    %c2 = arith.constant 2 : index
    %c0_6 = arith.constant 0 : index
    %17 = vector.load %arg2[%c2, %c0_6] : memref<4x128xf32, #tpu.memory_space<vmem>>, vector<1x128xf32>
    %18 = vector.broadcast %16 : vector<512x1xf32> to vector<512x128xf32>
    %19 = vector.broadcast %17 : vector<1x128xf32> to vector<512x128xf32>
    %20 = arith.mulf %18, %19 : vector<512x128xf32>
    %21 = arith.addf %15, %20 : vector<512x128xf32>
    %22 = vector.extract_strided_slice %1 {offsets = [0, 3], sizes = [512, 1], strides = [1, 1]} : vector<512x4xf32> to vector<512x1xf32>
    %c3 = arith.constant 3 : index
    %c0_7 = arith.constant 0 : index
    %23 = vector.load %arg2[%c3, %c0_7] : memref<4x128xf32, #tpu.memory_space<vmem>>, vector<1x128xf32>
    %24 = vector.broadcast %22 : vector<512x1xf32> to vector<512x128xf32>
    %25 = vector.broadcast %23 : vector<1x128xf32> to vector<512x128xf32>
    %26 = arith.mulf %24, %25 : vector<512x128xf32>
    %27 = arith.addf %21, %26 : vector<512x128xf32>
    %cst = arith.constant 0.000000e+00 : f32
    %28 = vector.broadcast %cst : f32 to vector<512x128xf32>
    %29 = arith.cmpf ogt, %27, %28 : vector<512x128xf32>
    %cst_8 = arith.constant 2.000000e-01 : f32
    %30 = vector.broadcast %cst_8 : f32 to vector<512x128xf32>
    %31 = arith.mulf %30, %27 : vector<512x128xf32>
    %32 = arith.select %29, %27, %31 : vector<512x128xi1>, vector<512x128xf32>
    %33 = arith.truncf %32 : vector<512x128xf32> to vector<512x128xbf16>
    %c0_9 = arith.constant 0 : index
    %c0_10 = arith.constant 0 : index
    %34 = vector.load %arg4[%c0_9, %c0_10] : memref<128x128xbf16, #tpu.memory_space<vmem>>, vector<128x128xbf16>
    %cst_11 = arith.constant dense<0.000000e+00> : vector<512x128xf32>
    %35 = tpu.matmul %33, %34, %cst_11 {dimension_numbers = #tpu.dot_dimension_numbers<[1], [0], [0], [1], [0, 0, 1, 1], [], []>} : vector<512x128xbf16>, vector<128x128xbf16>, vector<512x128xf32> -> vector<512x128xf32>
    %cst_12 = arith.constant dense<0.000000e+00> : vector<128xf32>
    %36 = vector.multi_reduction <add>, %35, %cst_12 [0] : vector<512x128xf32> to vector<128xf32>
    %37 = vector.shape_cast %36 : vector<128xf32> to vector<1x128xf32>
    %c0_13 = arith.constant 0 : index
    %c0_14 = arith.constant 0 : index
    %c0_15 = arith.constant 0 : index
    %38 = vector.load %arg5[%c0_13, %c0_14, %c0_15] : memref<1x2x128xf32, #tpu.memory_space<vmem>>, vector<1x1x128xf32>
    %39 = vector.shape_cast %38 : vector<1x1x128xf32> to vector<1x128xf32>
    %40 = vector.shape_cast %37 : vector<1x128xf32> to vector<1x1x128xf32>
    tpu.vector_store %arg5[%c0_13, %c0_14, %c0_15], %40 {strides = array<i32>} : memref<1x2x128xf32, #tpu.memory_space<vmem>>, vector<1x1x128xf32>,
    %41 = arith.mulf %35, %35 : vector<512x128xf32>
    %cst_16 = arith.constant dense<0.000000e+00> : vector<128xf32>
    %42 = vector.multi_reduction <add>, %41, %cst_16 [0] : vector<512x128xf32> to vector<128xf32>
    %43 = vector.shape_cast %42 : vector<128xf32> to vector<1x128xf32>
    %c0_17 = arith.constant 0 : index
    %c1_18 = arith.constant 1 : index
    %c0_19 = arith.constant 0 : index
    %44 = vector.load %arg5[%c0_17, %c1_18, %c0_19] : memref<1x2x128xf32, #tpu.memory_space<vmem>>, vector<1x1x128xf32>
    %45 = vector.shape_cast %44 : vector<1x1x128xf32> to vector<1x128xf32>
    %46 = vector.shape_cast %43 : vector<1x128xf32> to vector<1x1x128xf32>
    tpu.vector_store %arg5[%c0_17, %c1_18, %c0_19], %46 {strides = array<i32>} : memref<1x2x128xf32, #tpu.memory_space<vmem>>, vector<1x1x128xf32>,
    return
  }
  func.func @transform_0(%arg0: i32) -> (i32, i32) {
    %c0_i32 = arith.constant 0 : i32
    %c0_i32_0 = arith.constant 0 : i32
    return %arg0, %c0_i32 : i32, i32
  }
  func.func @transform_1(%arg0: i32) -> (i32, i32) {
    %c0_i32 = arith.constant 0 : i32
    %c0_i32_0 = arith.constant 0 : i32
    %c0_i32_1 = arith.constant 0 : i32
    return %c0_i32, %c0_i32_0 : i32, i32
  }
  func.func @transform_2(%arg0: i32) -> (i32, i32) {
    %c0_i32 = arith.constant 0 : i32
    %c0_i32_0 = arith.constant 0 : i32
    %c0_i32_1 = arith.constant 0 : i32
    return %c0_i32, %c0_i32_0 : i32, i32
  }
  func.func @transform_3(%arg0: i32) -> (i32, i32) {
    %c0_i32 = arith.constant 0 : i32
    %c0_i32_0 = arith.constant 0 : i32
    %c0_i32_1 = arith.constant 0 : i32
    return %c0_i32, %c0_i32_0 : i32, i32
  }
  func.func @transform_4(%arg0: i32) -> (i32, i32, i32) {
    %c0_i32 = arith.constant 0 : i32
    %c0_i32_0 = arith.constant 0 : i32
    %c0_i32_1 = arith.constant 0 : i32
    return %arg0, %c0_i32, %c0_i32_0 : i32, i32, i32
  }
}

</mosaic_0001>

<llo_original>
// kernel: tpu_custom_call.1
$region0: #{tpu_custom_call.1}
  #allocation0 [shape = 'u32[]', space=smem, size = 0x4, offset = 0x4, fixed_abs, tag = 'smem constant byte address 0x4 - core index']
  #allocation1 [shape = 'u32[72,128]{1,0:T(1,128)}', space=vmem, size = 0x9000, scoped, tag = 'internal scratch']
  %s0 = inlined_call_operand.vmem [shape: bf16[512,4], index: 0, kind: input, shape index: {}]
  %s1 = inlined_call_operand.vmem [shape: f32[4,128], index: 1, kind: input, shape index: {}]
  %s2 = inlined_call_operand.vmem [shape: f32[1,128], index: 2, kind: input, shape index: {}]
  %s3 = inlined_call_operand.vmem [shape: bf16[128,128], index: 3, kind: input, shape index: {}]
  %s4 = inlined_call_operand.hbm [shape: f32[1,2,128], index: 4, kind: output, shape index: {}]
  %s5 = sld [smem:[#allocation0]]
  $region26: #{tpu_custom_call.1} parent=0
    _
  %s7 = ssub.s32 1, %s5
  %s8 = scalar_select 0, %s7, %s5
  $region1: #{tpu_custom_call.1} parent=0
    #allocation2 [shape = 'u8[1024]{0}', space=vmem, size = 0x400, scoped, tag = 'output window, operand 0, single buffered']
    #allocation3 [shape = 's32[1]{0}', space=sflag, size = 0x4, scoped, tag = 'scoped memory for tpu_custom_call.1']
    %9 = vsyncpa [#allocation3], 0
    // Predicated region
    $region2: #{tpu_custom_call.1} parent=1 // pred_check
      _
    $region3: #{tpu_custom_call.1} parent=1 // pred_check_branch
      %11 = sbr.rel (0) target = $region5
    $region4: #{tpu_custom_call.1} parent=1 // pred_region
      _
    $region5: #{tpu_custom_call.1} parent=1 // pred_fallthru
      _
    // Predicated region
    $region6: #{tpu_custom_call.1} parent=1 // pred_check
      _
    $region7: #{tpu_custom_call.1} parent=1 // pred_check_branch
      %13 = sbr.rel (0) target = $region9
    $region8: #{tpu_custom_call.1} parent=1 // pred_region
      _
    $region9: #{tpu_custom_call.1} parent=1 // pred_fallthru
      _
    // Predicated region
    $region10: #{tpu_custom_call.1} parent=1 // pred_check
      _
    $region11: #{tpu_custom_call.1} parent=1 // pred_check_branch
      %15 = sbr.rel (0) target = $region13
    $region12: #{tpu_custom_call.1} parent=1 // pred_region
      _
    $region13: #{tpu_custom_call.1} parent=1 // pred_fallthru
      _
    // Predicated region
    $region14: #{tpu_custom_call.1} parent=1 // pred_check
      _
    $region15: #{tpu_custom_call.1} parent=1 // pred_check_branch
      %17 = sbr.rel (0) target = $region17
    $region16: #{tpu_custom_call.1} parent=1 // pred_region
      _
    $region17: #{tpu_custom_call.1} parent=1 // pred_fallthru
      _
    %v18 = vld [vmem:[%s0] sm:$0xf]
    %v19 = vld [vmem:[%s0 + $0x4] sm:$0xf]
    %v20 = vld [vmem:[%s0 + $0x8] sm:$0xf]
    %v21 = vld [vmem:[%s0 + $0xc] sm:$0xf]
    %v22 = vld [vmem:[%s0 + $0x10] sm:$0xf]
    %v23 = vld [vmem:[%s0 + $0x14] sm:$0xf]
    %v24 = vld [vmem:[%s0 + $0x18] sm:$0xf]
    %v25 = vld [vmem:[%s0 + $0x1c] sm:$0xf]
    %v26 = vld [vmem:[%s0 + $0x20] sm:$0xf]
    %v27 = vld [vmem:[%s0 + $0x24] sm:$0xf]
    %v28 = vld [vmem:[%s0 + $0x28] sm:$0xf]
    %v29 = vld [vmem:[%s0 + $0x2c] sm:$0xf]
    %v30 = vld [vmem:[%s0 + $0x30] sm:$0xf]
    %v31 = vld [vmem:[%s0 + $0x34] sm:$0xf]
    %v32 = vld [vmem:[%s0 + $0x38] sm:$0xf]
    %v33 = vld [vmem:[%s0 + $0x3c] sm:$0xf]
    %v34 = vld [vmem:[%s0 + $0x40] sm:$0xf]
    %v35 = vld [vmem:[%s0 + $0x44] sm:$0xf]
    %v36 = vld [vmem:[%s0 + $0x48] sm:$0xf]
    %v37 = vld [vmem:[%s0 + $0x4c] sm:$0xf]
    %v38 = vld [vmem:[%s0 + $0x50] sm:$0xf]
    %v39 = vld [vmem:[%s0 + $0x54] sm:$0xf]
    %v40 = vld [vmem:[%s0 + $0x58] sm:$0xf]
    %v41 = vld [vmem:[%s0 + $0x5c] sm:$0xf]
    %v42 = vld [vmem:[%s0 + $0x60] sm:$0xf]
    %v43 = vld [vmem:[%s0 + $0x64] sm:$0xf]
    %v44 = vld [vmem:[%s0 + $0x68] sm:$0xf]
    %v45 = vld [vmem:[%s0 + $0x6c] sm:$0xf]
    %v46 = vld [vmem:[%s0 + $0x70] sm:$0xf]
    %v47 = vld [vmem:[%s0 + $0x74] sm:$0xf]
    %v48 = vld [vmem:[%s0 + $0x78] sm:$0xf]
    %v49 = vld [vmem:[%s0 + $0x7c] sm:$0xf]
    %v50 = vld [vmem:[%s0 + $0x80] sm:$0xf]
    %v51 = vld [vmem:[%s0 + $0x84] sm:$0xf]
    %v52 = vld [vmem:[%s0 + $0x88] sm:$0xf]
    %v53 = vld [vmem:[%s0 + $0x8c] sm:$0xf]
    %v54 = vld [vmem:[%s0 + $0x90] sm:$0xf]
    %v55 = vld [vmem:[%s0 + $0x94] sm:$0xf]
    %v56 = vld [vmem:[%s0 + $0x98] sm:$0xf]
    %v57 = vld [vmem:[%s0 + $0x9c] sm:$0xf]
    %v58 = vld [vmem:[%s0 + $0xa0] sm:$0xf]
    %v59 = vld [vmem:[%s0 + $0xa4] sm:$0xf]
    %v60 = vld [vmem:[%s0 + $0xa8] sm:$0xf]
    %v61 = vld [vmem:[%s0 + $0xac] sm:$0xf]
    %v62 = vld [vmem:[%s0 + $0xb0] sm:$0xf]
    %v63 = vld [vmem:[%s0 + $0xb4] sm:$0xf]
    %v64 = vld [vmem:[%s0 + $0xb8] sm:$0xf]
    %v65 = vld [vmem:[%s0 + $0xbc] sm:$0xf]
    %v66 = vld [vmem:[%s0 + $0xc0] sm:$0xf]
    %v67 = vld [vmem:[%s0 + $0xc4] sm:$0xf]
    %v68 = vld [vmem:[%s0 + $0xc8] sm:$0xf]
    %v69 = vld [vmem:[%s0 + $0xcc] sm:$0xf]
    %v70 = vld [vmem:[%s0 + $0xd0] sm:$0xf]
    %v71 = vld [vmem:[%s0 + $0xd4] sm:$0xf]
    %v72 = vld [vmem:[%s0 + $0xd8] sm:$0xf]
    %v73 = vld [vmem:[%s0 + $0xdc] sm:$0xf]
    %v74 = vld [vmem:[%s0 + $0xe0] sm:$0xf]
    %v75 = vld [vmem:[%s0 + $0xe4] sm:$0xf]
    %v76 = vld [vmem:[%s0 + $0xe8] sm:$0xf]
    %v77 = vld [vmem:[%s0 + $0xec] sm:$0xf]
    %v78 = vld [vmem:[%s0 + $0xf0] sm:$0xf]
    %v79 = vld [vmem:[%s0 + $0xf4] sm:$0xf]
    %v80 = vld [vmem:[%s0 + $0xf8] sm:$0xf]
    %v81 = vld [vmem:[%s0 + $0xfc] sm:$0xf]
    %v82 = vunpack.c.l.bf16 %v18
    %v83 = vunpack.c.l.bf16 %v19
    %v84 = vunpack.c.l.bf16 %v20
    %v85 = vunpack.c.l.bf16 %v21
    %v86 = vunpack.c.l.bf16 %v22
    %v87 = vunpack.c.l.bf16 %v23
    %v88 = vunpack.c.l.bf16 %v24
    %v89 = vunpack.c.l.bf16 %v25
    %v90 = vunpack.c.l.bf16 %v26
    %v91 = vunpack.c.l.bf16 %v27
    %v92 = vunpack.c.l.bf16 %v28
    %v93 = vunpack.c.l.bf16 %v29
    %v94 = vunpack.c.l.bf16 %v30
    %v95 = vunpack.c.l.bf16 %v31
    %v96 = vunpack.c.l.bf16 %v32
    %v97 = vunpack.c.l.bf16 %v33
    %v98 = vunpack.c.l.bf16 %v34
    %v99 = vunpack.c.l.bf16 %v35
    %v100 = vunpack.c.l.bf16 %v36
    %v101 = vunpack.c.l.bf16 %v37
    %v102 = vunpack.c.l.bf16 %v38
    %v103 = vunpack.c.l.bf16 %v39
    %v104 = vunpack.c.l.bf16 %v40
    %v105 = vunpack.c.l.bf16 %v41
    %v106 = vunpack.c.l.bf16 %v42
    %v107 = vunpack.c.l.bf16 %v43
    %v108 = vunpack.c.l.bf16 %v44
    %v109 = vunpack.c.l.bf16 %v45
    %v110 = vunpack.c.l.bf16 %v46
    %v111 = vunpack.c.l.bf16 %v47
    %v112 = vunpack.c.l.bf16 %v48
    %v113 = vunpack.c.l.bf16 %v49
    %v114 = vunpack.c.l.bf16 %v50
    %v115 = vunpack.c.l.bf16 %v51
    %v116 = vunpack.c.l.bf16 %v52
    %v117 = vunpack.c.l.bf16 %v53
    %v118 = vunpack.c.l.bf16 %v54
    %v119 = vunpack.c.l.bf16 %v55
    %v120 = vunpack.c.l.bf16 %v56
    %v121 = vunpack.c.l.bf16 %v57
    %v122 = vunpack.c.l.bf16 %v58
    %v123 = vunpack.c.l.bf16 %v59
    %v124 = vunpack.c.l.bf16 %v60
    %v125 = vunpack.c.l.bf16 %v61
    %v126 = vunpack.c.l.bf16 %v62
    %v127 = vunpack.c.l.bf16 %v63
    %v128 = vunpack.c.l.bf16 %v64
    %v129 = vunpack.c.l.bf16 %v65
    %v130 = vunpack.c.l.bf16 %v66
    %v131 = vunpack.c.l.bf16 %v67
    %v132 = vunpack.c.l.bf16 %v68
    %v133 = vunpack.c.l.bf16 %v69
    %v134 = vunpack.c.l.bf16 %v70
    %v135 = vunpack.c.l.bf16 %v71
    %v136 = vunpack.c.l.bf16 %v72
    %v137 = vunpack.c.l.bf16 %v73
    %v138 = vunpack.c.l.bf16 %v74
    %v139 = vunpack.c.l.bf16 %v75
    %v140 = vunpack.c.l.bf16 %v76
    %v141 = vunpack.c.l.bf16 %v77
    %v142 = vunpack.c.l.bf16 %v78
    %v143 = vunpack.c.l.bf16 %v79
    %v144 = vunpack.c.l.bf16 %v80
    %v145 = vunpack.c.l.bf16 %v81
    %v146 = vld [vmem:[%s2] sm:$0x1]
    %v147 = vld [vmem:[%s1] sm:$0x1]
    %149 = vset.pattern.permute.xlu0 0
    %150 = vperm.xlu0 %149, %v82
    %v151 = vpop.permute.xlu0 %150
    %154 = vset.pattern.permute.xlu0 0
    %155 = vperm.xlu0 %154, %v83
    %v156 = vpop.permute.xlu0 %155
    %159 = vset.pattern.permute.xlu0 0
    %160 = vperm.xlu0 %159, %v84
    %v161 = vpop.permute.xlu0 %160
    %164 = vset.pattern.permute.xlu0 0
    %165 = vperm.xlu0 %164, %v85
    %v166 = vpop.permute.xlu0 %165
    %169 = vset.pattern.permute.xlu0 0
    %170 = vperm.xlu0 %169, %v86
    %v171 = vpop.permute.xlu0 %170
    %174 = vset.pattern.permute.xlu0 0
    %175 = vperm.xlu0 %174, %v87
    %v176 = vpop.permute.xlu0 %175
    %179 = vset.pattern.permute.xlu0 0
    %180 = vperm.xlu0 %179, %v88
    %v181 = vpop.permute.xlu0 %180
    %184 = vset.pattern.permute.xlu0 0
    %185 = vperm.xlu0 %184, %v89
    %v186 = vpop.permute.xlu0 %185
    %189 = vset.pattern.permute.xlu0 0
    %190 = vperm.xlu0 %189, %v90
    %v191 = vpop.permute.xlu0 %190
    %194 = vset.pattern.permute.xlu0 0
    %195 = vperm.xlu0 %194, %v91
    %v196 = vpop.permute.xlu0 %195
    %199 = vset.pattern.permute.xlu0 0
    %200 = vperm.xlu0 %199, %v92
    %v201 = vpop.permute.xlu0 %200
    %204 = vset.pattern.permute.xlu0 0
    %205 = vperm.xlu0 %204, %v93
    %v206 = vpop.permute.xlu0 %205
    %209 = vset.pattern.permute.xlu0 0
    %210 = vperm.xlu0 %209, %v94
    %v211 = vpop.permute.xlu0 %210
    %214 = vset.pattern.permute.xlu0 0
    %215 = vperm.xlu0 %214, %v95
    %v216 = vpop.permute.xlu0 %215
    %219 = vset.pattern.permute.xlu0 0
    %220 = vperm.xlu0 %219, %v96
    %v221 = vpop.permute.xlu0 %220
    %224 = vset.pattern.permute.xlu0 0
    %225 = vperm.xlu0 %224, %v97
    %v226 = vpop.permute.xlu0 %225
    %229 = vset.pattern.permute.xlu0 0
    %230 = vperm.xlu0 %229, %v98
    %v231 = vpop.permute.xlu0 %230
    %234 = vset.pattern.permute.xlu0 0
    %235 = vperm.xlu0 %234, %v99
    %v236 = vpop.permute.xlu0 %235
    %239 = vset.pattern.permute.xlu0 0
    %240 = vperm.xlu0 %239, %v100
    %v241 = vpop.permute.xlu0 %240
    %244 = vset.pattern.permute.xlu0 0
    %245 = vperm.xlu0 %244, %v101
    %v246 = vpop.permute.xlu0 %245
    %249 = vset.pattern.permute.xlu0 0
    %250 = vperm.xlu0 %249, %v102
    %v251 = vpop.permute.xlu0 %250
    %254 = vset.pattern.permute.xlu0 0
    %255 = vperm.xlu0 %254, %v103
    %v256 = vpop.permute.xlu0 %255
    %259 = vset.pattern.permute.xlu0 0
    %260 = vperm.xlu0 %259, %v104
    %v261 = vpop.permute.xlu0 %260
    %264 = vset.pattern.permute.xlu0 0
    %265 = vperm.xlu0 %264, %v105
    %v266 = vpop.permute.xlu0 %265
    %269 = vset.pattern.permute.xlu0 0
    %270 = vperm.xlu0 %269, %v106
    %v271 = vpop.permute.xlu0 %270
    %274 = vset.pattern.permute.xlu0 0
    %275 = vperm.xlu0 %274, %v107
    %v276 = vpop.permute.xlu0 %275
    %279 = vset.pattern.permute.xlu0 0
    %280 = vperm.xlu0 %279, %v108
    %v281 = vpop.permute.xlu0 %280
    %284 = vset.pattern.permute.xlu0 0
    %285 = vperm.xlu0 %284, %v109
    %v286 = vpop.permute.xlu0 %285
    %289 = vset.pattern.permute.xlu0 0
    %290 = vperm.xlu0 %289, %v110
    %v291 = vpop.permute.xlu0 %290
    %294 = vset.pattern.permute.xlu0 0
    %295 = vperm.xlu0 %294, %v111
    %v296 = vpop.permute.xlu0 %295
    %299 = vset.pattern.permute.xlu0 0
    %300 = vperm.xlu0 %299, %v112
    %v301 = vpop.permute.xlu0 %300
    %304 = vset.pattern.permute.xlu0 0
    %305 = vperm.xlu0 %304, %v113
    %v306 = vpop.permute.xlu0 %305
    %309 = vset.pattern.permute.xlu0 0
    %310 = vperm.xlu0 %309, %v114
    %v311 = vpop.permute.xlu0 %310
    %314 = vset.pattern.permute.xlu0 0
    %315 = vperm.xlu0 %314, %v115
    %v316 = vpop.permute.xlu0 %315
    %319 = vset.pattern.permute.xlu0 0
    %320 = vperm.xlu0 %319, %v116
    %v321 = vpop.permute.xlu0 %320
    %324 = vset.pattern.permute.xlu0 0
    %325 = vperm.xlu0 %324, %v117
    %v326 = vpop.permute.xlu0 %325
    %329 = vset.pattern.permute.xlu0 0
    %330 = vperm.xlu0 %329, %v118
    %v331 = vpop.permute.xlu0 %330
    %334 = vset.pattern.permute.xlu0 0
    %335 = vperm.xlu0 %334, %v119
    %v336 = vpop.permute.xlu0 %335
    %339 = vset.pattern.permute.xlu0 0
    %340 = vperm.xlu0 %339, %v120
    %v341 = vpop.permute.xlu0 %340
    %344 = vset.pattern.permute.xlu0 0
    %345 = vperm.xlu0 %344, %v121
    %v346 = vpop.permute.xlu0 %345
    %349 = vset.pattern.permute.xlu0 0
    %350 = vperm.xlu0 %349, %v122
    %v351 = vpop.permute.xlu0 %350
    %354 = vset.pattern.permute.xlu0 0
    %355 = vperm.xlu0 %354, %v123
    %v356 = vpop.permute.xlu0 %355
    %359 = vset.pattern.permute.xlu0 0
    %360 = vperm.xlu0 %359, %v124
    %v361 = vpop.permute.xlu0 %360
    %364 = vset.pattern.permute.xlu0 0
    %365 = vperm.xlu0 %364, %v125
    %v366 = vpop.permute.xlu0 %365
    %369 = vset.pattern.permute.xlu0 0
    %370 = vperm.xlu0 %369, %v126
    %v371 = vpop.permute.xlu0 %370
    %374 = vset.pattern.permute.xlu0 0
    %375 = vperm.xlu0 %374, %v127
    %v376 = vpop.permute.xlu0 %375
    %379 = vset.pattern.permute.xlu0 0
    %380 = vperm.xlu0 %379, %v128
    %v381 = vpop.permute.xlu0 %380
    %384 = vset.pattern.permute.xlu0 0
    %385 = vperm.xlu0 %384, %v129
    %v386 = vpop.permute.xlu0 %385
    %389 = vset.pattern.permute.xlu0 0
    %390 = vperm.xlu0 %389, %v130
    %v391 = vpop.permute.xlu0 %390
    %394 = vset.pattern.permute.xlu0 0
    %395 = vperm.xlu0 %394, %v131
    %v396 = vpop.permute.xlu0 %395
    %399 = vset.pattern.permute.xlu0 0
    %400 = vperm.xlu0 %399, %v132
    %v401 = vpop.permute.xlu0 %400
    %404 = vset.pattern.permute.xlu0 0
    %405 = vperm.xlu0 %404, %v133
    %v406 = vpop.permute.xlu0 %405
    %409 = vset.pattern.permute.xlu0 0
    %410 = vperm.xlu0 %409, %v134
    %v411 = vpop.permute.xlu0 %410
    %414 = vset.pattern.permute.xlu0 0
    %415 = vperm.xlu0 %414, %v135
    %v416 = vpop.permute.xlu0 %415
    %419 = vset.pattern.permute.xlu0 0
    %420 = vperm.xlu0 %419, %v136
    %v421 = vpop.permute.xlu0 %420
    %424 = vset.pattern.permute.xlu0 0
    %425 = vperm.xlu0 %424, %v137
    %v426 = vpop.permute.xlu0 %425
    %429 = vset.pattern.permute.xlu0 0
    %430 = vperm.xlu0 %429, %v138
    %v431 = vpop.permute.xlu0 %430
    %434 = vset.pattern.permute.xlu0 0
    %435 = vperm.xlu0 %434, %v139
    %v436 = vpop.permute.xlu0 %435
    %439 = vset.pattern.permute.xlu0 0
    %440 = vperm.xlu0 %439, %v140
    %v441 = vpop.permute.xlu0 %440
    %444 = vset.pattern.permute.xlu0 0
    %445 = vperm.xlu0 %444, %v141
    %v446 = vpop.permute.xlu0 %445
    %449 = vset.pattern.permute.xlu0 0
    %450 = vperm.xlu0 %449, %v142
    %v451 = vpop.permute.xlu0 %450
    %454 = vset.pattern.permute.xlu0 0
    %455 = vperm.xlu0 %454, %v143
    %v456 = vpop.permute.xlu0 %455
    %459 = vset.pattern.permute.xlu0 0
    %460 = vperm.xlu0 %459, %v144
    %v461 = vpop.permute.xlu0 %460
    %464 = vset.pattern.permute.xlu0 0
    %465 = vperm.xlu0 %464, %v145
    %v466 = vpop.permute.xlu0 %465
    %v468 = vperm.slane %v147, 0
    %v469 = vmul.f32 %v151, %v468
    %v470 = vmul.f32 %v156, %v468
    %v471 = vmul.f32 %v161, %v468
    %v472 = vmul.f32 %v166, %v468
    %v473 = vmul.f32 %v171, %v468
    %v474 = vmul.f32 %v176, %v468
    %v475 = vmul.f32 %v181, %v468
    %v476 = vmul.f32 %v186, %v468
    %v477 = vmul.f32 %v191, %v468
    %v478 = vmul.f32 %v196, %v468
    %v479 = vmul.f32 %v201, %v468
    %v480 = vmul.f32 %v206, %v468
    %v481 = vmul.f32 %v211, %v468
    %v482 = vmul.f32 %v216, %v468
    %v483 = vmul.f32 %v221, %v468
    %v484 = vmul.f32 %v226, %v468
    %v485 = vmul.f32 %v231, %v468
    %v486 = vmul.f32 %v236, %v468
    %v487 = vmul.f32 %v241, %v468
    %v488 = vmul.f32 %v246, %v468
    %v489 = vmul.f32 %v251, %v468
    %v490 = vmul.f32 %v256, %v468
    %v491 = vmul.f32 %v261, %v468
    %v492 = vmul.f32 %v266, %v468
    %v493 = vmul.f32 %v271, %v468
    %v494 = vmul.f32 %v276, %v468
    %v495 = vmul.f32 %v281, %v468
    %v496 = vmul.f32 %v286, %v468
    %v497 = vmul.f32 %v291, %v468
    %v498 = vmul.f32 %v296, %v468
    %v499 = vmul.f32 %v301, %v468
    %v500 = vmul.f32 %v306, %v468
    %v501 = vmul.f32 %v311, %v468
    %v502 = vmul.f32 %v316, %v468
    %v503 = vmul.f32 %v321, %v468
    %v504 = vmul.f32 %v326, %v468
    %v505 = vmul.f32 %v331, %v468
    %v506 = vmul.f32 %v336, %v468
    %v507 = vmul.f32 %v341, %v468
    %v508 = vmul.f32 %v346, %v468
    %v509 = vmul.f32 %v351, %v468
    %v510 = vmul.f32 %v356, %v468
    %v511 = vmul.f32 %v361, %v468
    %v512 = vmul.f32 %v366, %v468
    %v513 = vmul.f32 %v371, %v468
    %v514 = vmul.f32 %v376, %v468
    %v515 = vmul.f32 %v381, %v468
    %v516 = vmul.f32 %v386, %v468
    %v517 = vmul.f32 %v391, %v468
    %v518 = vmul.f32 %v396, %v468
    %v519 = vmul.f32 %v401, %v468
    %v520 = vmul.f32 %v406, %v468
    %v521 = vmul.f32 %v411, %v468
    %v522 = vmul.f32 %v416, %v468
    %v523 = vmul.f32 %v421, %v468
    %v524 = vmul.f32 %v426, %v468
    %v525 = vmul.f32 %v431, %v468
    %v526 = vmul.f32 %v436, %v468
    %v527 = vmul.f32 %v441, %v468
    %v528 = vmul.f32 %v446, %v468
    %v529 = vmul.f32 %v451, %v468
    %v530 = vmul.f32 %v456, %v468
    %v531 = vmul.f32 %v461, %v468
    %v532 = vmul.f32 %v466, %v468
    %v534 = vperm.slane %v146, 0
    %v536 = vadd.f32 %v534, %v469
    %v537 = vadd.f32 %v534, %v470
    %v538 = vadd.f32 %v534, %v471
    %v539 = vadd.f32 %v534, %v472
    %v540 = vadd.f32 %v534, %v473
    %v541 = vadd.f32 %v534, %v474
    %v542 = vadd.f32 %v534, %v475
    %v543 = vadd.f32 %v534, %v476
    %v544 = vadd.f32 %v534, %v477
    %v545 = vadd.f32 %v534, %v478
    %v546 = vadd.f32 %v534, %v479
    %v547 = vadd.f32 %v534, %v480
    %v548 = vadd.f32 %v534, %v481
    %v549 = vadd.f32 %v534, %v482
    %v550 = vadd.f32 %v534, %v483
    %v551 = vadd.f32 %v534, %v484
    %v552 = vadd.f32 %v534, %v485
    %v553 = vadd.f32 %v534, %v486
    %v554 = vadd.f32 %v534, %v487
    %v555 = vadd.f32 %v534, %v488
    %v556 = vadd.f32 %v534, %v489
    %v557 = vadd.f32 %v534, %v490
    %v558 = vadd.f32 %v534, %v491
    %v559 = vadd.f32 %v534, %v492
    %v560 = vadd.f32 %v534, %v493
    %v561 = vadd.f32 %v534, %v494
    %v562 = vadd.f32 %v534, %v495
    %v563 = vadd.f32 %v534, %v496
    %v564 = vadd.f32 %v534, %v497
    %v565 = vadd.f32 %v534, %v498
    %v566 = vadd.f32 %v534, %v499
    %v567 = vadd.f32 %v534, %v500
    %v568 = vadd.f32 %v534, %v501
    %v569 = vadd.f32 %v534, %v502
    %v570 = vadd.f32 %v534, %v503
    %v571 = vadd.f32 %v534, %v504
    %v572 = vadd.f32 %v534, %v505
    %v573 = vadd.f32 %v534, %v506
    %v574 = vadd.f32 %v534, %v507
    %v575 = vadd.f32 %v534, %v508
    %v576 = vadd.f32 %v534, %v509
    %v577 = vadd.f32 %v534, %v510
    %v578 = vadd.f32 %v534, %v511
    %v579 = vadd.f32 %v534, %v512
    %v580 = vadd.f32 %v534, %v513
    %v581 = vadd.f32 %v534, %v514
    %v582 = vadd.f32 %v534, %v515
    %v583 = vadd.f32 %v534, %v516
    %v584 = vadd.f32 %v534, %v517
    %v585 = vadd.f32 %v534, %v518
    %v586 = vadd.f32 %v534, %v519
    %v587 = vadd.f32 %v534, %v520
    %v588 = vadd.f32 %v534, %v521
    %v589 = vadd.f32 %v534, %v522
    %v590 = vadd.f32 %v534, %v523
    %v591 = vadd.f32 %v534, %v524
    %v592 = vadd.f32 %v534, %v525
    %v593 = vadd.f32 %v534, %v526
    %v594 = vadd.f32 %v534, %v527
    %v595 = vadd.f32 %v534, %v528
    %v596 = vadd.f32 %v534, %v529
    %v597 = vadd.f32 %v534, %v530
    %v598 = vadd.f32 %v534, %v531
    %v599 = vadd.f32 %v534, %v532
    %v600 = vld [vmem:[%s1 + $0x1] sm:$0x1]
    %601 = vset.pattern.permute.xlu0 1
    %602 = vperm.xlu0 %601, %v82
    %v603 = vpop.permute.xlu0 %602
    %605 = vset.pattern.permute.xlu0 1
    %606 = vperm.xlu0 %605, %v83
    %v607 = vpop.permute.xlu0 %606
    %609 = vset.pattern.permute.xlu0 1
    %610 = vperm.xlu0 %609, %v84
    %v611 = vpop.permute.xlu0 %610
    %613 = vset.pattern.permute.xlu0 1
    %614 = vperm.xlu0 %613, %v85
    %v615 = vpop.permute.xlu0 %614
    %617 = vset.pattern.permute.xlu0 1
    %618 = vperm.xlu0 %617, %v86
    %v619 = vpop.permute.xlu0 %618
    %621 = vset.pattern.permute.xlu0 1
    %622 = vperm.xlu0 %621, %v87
    %v623 = vpop.permute.xlu0 %622
    %625 = vset.pattern.permute.xlu0 1
    %626 = vperm.xlu0 %625, %v88
    %v627 = vpop.permute.xlu0 %626
    %629 = vset.pattern.permute.xlu0 1
    %630 = vperm.xlu0 %629, %v89
    %v631 = vpop.permute.xlu0 %630
    %633 = vset.pattern.permute.xlu0 1
    %634 = vperm.xlu0 %633, %v90
    %v635 = vpop.permute.xlu0 %634
    %637 = vset.pattern.permute.xlu0 1
    %638 = vperm.xlu0 %637, %v91
    %v639 = vpop.permute.xlu0 %638
    %641 = vset.pattern.permute.xlu0 1
    %642 = vperm.xlu0 %641, %v92
    %v643 = vpop.permute.xlu0 %642
    %645 = vset.pattern.permute.xlu0 1
    %646 = vperm.xlu0 %645, %v93
    %v647 = vpop.permute.xlu0 %646
    %649 = vset.pattern.permute.xlu0 1
    %650 = vperm.xlu0 %649, %v94
    %v651 = vpop.permute.xlu0 %650
    %653 = vset.pattern.permute.xlu0 1
    %654 = vperm.xlu0 %653, %v95
    %v655 = vpop.permute.xlu0 %654
    %657 = vset.pattern.permute.xlu0 1
    %658 = vperm.xlu0 %657, %v96
    %v659 = vpop.permute.xlu0 %658
    %661 = vset.pattern.permute.xlu0 1
    %662 = vperm.xlu0 %661, %v97
    %v663 = vpop.permute.xlu0 %662
    %665 = vset.pattern.permute.xlu0 1
    %666 = vperm.xlu0 %665, %v98
    %v667 = vpop.permute.xlu0 %666
    %669 = vset.pattern.permute.xlu0 1
    %670 = vperm.xlu0 %669, %v99
    %v671 = vpop.permute.xlu0 %670
    %673 = vset.pattern.permute.xlu0 1
    %674 = vperm.xlu0 %673, %v100
    %v675 = vpop.permute.xlu0 %674
    %677 = vset.pattern.permute.xlu0 1
    %678 = vperm.xlu0 %677, %v101
    %v679 = vpop.permute.xlu0 %678
    %681 = vset.pattern.permute.xlu0 1
    %682 = vperm.xlu0 %681, %v102
    %v683 = vpop.permute.xlu0 %682
    %685 = vset.pattern.permute.xlu0 1
    %686 = vperm.xlu0 %685, %v103
    %v687 = vpop.permute.xlu0 %686
    %689 = vset.pattern.permute.xlu0 1
    %690 = vperm.xlu0 %689, %v104
    %v691 = vpop.permute.xlu0 %690
    %693 = vset.pattern.permute.xlu0 1
    %694 = vperm.xlu0 %693, %v105
    %v695 = vpop.permute.xlu0 %694
    %697 = vset.pattern.permute.xlu0 1
    %698 = vperm.xlu0 %697, %v106
    %v699 = vpop.permute.xlu0 %698
    %701 = vset.pattern.permute.xlu0 1
    %702 = vperm.xlu0 %701, %v107
    %v703 = vpop.permute.xlu0 %702
    %705 = vset.pattern.permute.xlu0 1
    %706 = vperm.xlu0 %705, %v108
    %v707 = vpop.permute.xlu0 %706
    %709 = vset.pattern.permute.xlu0 1
    %710 = vperm.xlu0 %709, %v109
    %v711 = vpop.permute.xlu0 %710
    %713 = vset.pattern.permute.xlu0 1
    %714 = vperm.xlu0 %713, %v110
    %v715 = vpop.permute.xlu0 %714
    %717 = vset.pattern.permute.xlu0 1
    %718 = vperm.xlu0 %717, %v111
    %v719 = vpop.permute.xlu0 %718
    %721 = vset.pattern.permute.xlu0 1
    %722 = vperm.xlu0 %721, %v112
    %v723 = vpop.permute.xlu0 %722
    %725 = vset.pattern.permute.xlu0 1
    %726 = vperm.xlu0 %725, %v113
    %v727 = vpop.permute.xlu0 %726
    %729 = vset.pattern.permute.xlu0 1
    %730 = vperm.xlu0 %729, %v114
    %v731 = vpop.permute.xlu0 %730
    %733 = vset.pattern.permute.xlu0 1
    %734 = vperm.xlu0 %733, %v115
    %v735 = vpop.permute.xlu0 %734
    %737 = vset.pattern.permute.xlu0 1
    %738 = vperm.xlu0 %737, %v116
    %v739 = vpop.permute.xlu0 %738
    %741 = vset.pattern.permute.xlu0 1
    %742 = vperm.xlu0 %741, %v117
    %v743 = vpop.permute.xlu0 %742
    %745 = vset.pattern.permute.xlu0 1
    %746 = vperm.xlu0 %745, %v118
    %v747 = vpop.permute.xlu0 %746
    %749 = vset.pattern.permute.xlu0 1
    %750 = vperm.xlu0 %749, %v119
    %v751 = vpop.permute.xlu0 %750
    %753 = vset.pattern.permute.xlu0 1
    %754 = vperm.xlu0 %753, %v120
    %v755 = vpop.permute.xlu0 %754
    %757 = vset.pattern.permute.xlu0 1
    %758 = vperm.xlu0 %757, %v121
    %v759 = vpop.permute.xlu0 %758
    %761 = vset.pattern.permute.xlu0 1
    %762 = vperm.xlu0 %761, %v122
    %v763 = vpop.permute.xlu0 %762
    %765 = vset.pattern.permute.xlu0 1
    %766 = vperm.xlu0 %765, %v123
    %v767 = vpop.permute.xlu0 %766
    %769 = vset.pattern.permute.xlu0 1
    %770 = vperm.xlu0 %769, %v124
    %v771 = vpop.permute.xlu0 %770
    %773 = vset.pattern.permute.xlu0 1
    %774 = vperm.xlu0 %773, %v125
    %v775 = vpop.permute.xlu0 %774
    %777 = vset.pattern.permute.xlu0 1
    %778 = vperm.xlu0 %777, %v126
    %v779 = vpop.permute.xlu0 %778
    %781 = vset.pattern.permute.xlu0 1
    %782 = vperm.xlu0 %781, %v127
    %v783 = vpop.permute.xlu0 %782
    %785 = vset.pattern.permute.xlu0 1
    %786 = vperm.xlu0 %785, %v128
    %v787 = vpop.permute.xlu0 %786
    %789 = vset.pattern.permute.xlu0 1
    %790 = vperm.xlu0 %789, %v129
    %v791 = vpop.permute.xlu0 %790
    %793 = vset.pattern.permute.xlu0 1
    %794 = vperm.xlu0 %793, %v130
    %v795 = vpop.permute.xlu0 %794
    %797 = vset.pattern.permute.xlu0 1
    %798 = vperm.xlu0 %797, %v131
    %v799 = vpop.permute.xlu0 %798
    %801 = vset.pattern.permute.xlu0 1
    %802 = vperm.xlu0 %801, %v132
    %v803 = vpop.permute.xlu0 %802
    %805 = vset.pattern.permute.xlu0 1
    %806 = vperm.xlu0 %805, %v133
    %v807 = vpop.permute.xlu0 %806
    %809 = vset.pattern.permute.xlu0 1
    %810 = vperm.xlu0 %809, %v134
    %v811 = vpop.permute.xlu0 %810
    %813 = vset.pattern.permute.xlu0 1
    %814 = vperm.xlu0 %813, %v135
    %v815 = vpop.permute.xlu0 %814
    %817 = vset.pattern.permute.xlu0 1
    %818 = vperm.xlu0 %817, %v136
    %v819 = vpop.permute.xlu0 %818
    %821 = vset.pattern.permute.xlu0 1
    %822 = vperm.xlu0 %821, %v137
    %v823 = vpop.permute.xlu0 %822
    %825 = vset.pattern.permute.xlu0 1
    %826 = vperm.xlu0 %825, %v138
    %v827 = vpop.permute.xlu0 %826
    %829 = vset.pattern.permute.xlu0 1
    %830 = vperm.xlu0 %829, %v139
    %v831 = vpop.permute.xlu0 %830
    %833 = vset.pattern.permute.xlu0 1
    %834 = vperm.xlu0 %833, %v140
    %v835 = vpop.permute.xlu0 %834
    %837 = vset.pattern.permute.xlu0 1
    %838 = vperm.xlu0 %837, %v141
    %v839 = vpop.permute.xlu0 %838
    %841 = vset.pattern.permute.xlu0 1
    %842 = vperm.xlu0 %841, %v142
    %v843 = vpop.permute.xlu0 %842
    %845 = vset.pattern.permute.xlu0 1
    %846 = vperm.xlu0 %845, %v143
    %v847 = vpop.permute.xlu0 %846
    %849 = vset.pattern.permute.xlu0 1
    %850 = vperm.xlu0 %849, %v144
    %v851 = vpop.permute.xlu0 %850
    %853 = vset.pattern.permute.xlu0 1
    %854 = vperm.xlu0 %853, %v145
    %v855 = vpop.permute.xlu0 %854
    %v857 = vperm.slane %v600, 0
    %v858 = vmul.f32 %v603, %v857
    %v859 = vmul.f32 %v607, %v857
    %v860 = vmul.f32 %v611, %v857
    %v861 = vmul.f32 %v615, %v857
    %v862 = vmul.f32 %v619, %v857
    %v863 = vmul.f32 %v623, %v857
    %v864 = vmul.f32 %v627, %v857
    %v865 = vmul.f32 %v631, %v857
    %v866 = vmul.f32 %v635, %v857
    %v867 = vmul.f32 %v639, %v857
    %v868 = vmul.f32 %v643, %v857
    %v869 = vmul.f32 %v647, %v857
    %v870 = vmul.f32 %v651, %v857
    %v871 = vmul.f32 %v655, %v857
    %v872 = vmul.f32 %v659, %v857
    %v873 = vmul.f32 %v663, %v857
    %v874 = vmul.f32 %v667, %v857
    %v875 = vmul.f32 %v671, %v857
    %v876 = vmul.f32 %v675, %v857
    %v877 = vmul.f32 %v679, %v857
    %v878 = vmul.f32 %v683, %v857
    %v879 = vmul.f32 %v687, %v857
    %v880 = vmul.f32 %v691, %v857
    %v881 = vmul.f32 %v695, %v857
    %v882 = vmul.f32 %v699, %v857
    %v883 = vmul.f32 %v703, %v857
    %v884 = vmul.f32 %v707, %v857
    %v885 = vmul.f32 %v711, %v857
    %v886 = vmul.f32 %v715, %v857
    %v887 = vmul.f32 %v719, %v857
    %v888 = vmul.f32 %v723, %v857
    %v889 = vmul.f32 %v727, %v857
    %v890 = vmul.f32 %v731, %v857
    %v891 = vmul.f32 %v735, %v857
    %v892 = vmul.f32 %v739, %v857
    %v893 = vmul.f32 %v743, %v857
    %v894 = vmul.f32 %v747, %v857
    %v895 = vmul.f32 %v751, %v857
    %v896 = vmul.f32 %v755, %v857
    %v897 = vmul.f32 %v759, %v857
    %v898 = vmul.f32 %v763, %v857
    %v899 = vmul.f32 %v767, %v857
    %v900 = vmul.f32 %v771, %v857
    %v901 = vmul.f32 %v775, %v857
    %v902 = vmul.f32 %v779, %v857
    %v903 = vmul.f32 %v783, %v857
    %v904 = vmul.f32 %v787, %v857
    %v905 = vmul.f32 %v791, %v857
    %v906 = vmul.f32 %v795, %v857
    %v907 = vmul.f32 %v799, %v857
    %v908 = vmul.f32 %v803, %v857
    %v909 = vmul.f32 %v807, %v857
    %v910 = vmul.f32 %v811, %v857
    %v911 = vmul.f32 %v815, %v857
    %v912 = vmul.f32 %v819, %v857
    %v913 = vmul.f32 %v823, %v857
    %v914 = vmul.f32 %v827, %v857
    %v915 = vmul.f32 %v831, %v857
    %v916 = vmul.f32 %v835, %v857
    %v917 = vmul.f32 %v839, %v857
    %v918 = vmul.f32 %v843, %v857
    %v919 = vmul.f32 %v847, %v857
    %v920 = vmul.f32 %v851, %v857
    %v921 = vmul.f32 %v855, %v857
    %v922 = vadd.f32 %v536, %v858
    %v923 = vadd.f32 %v537, %v859
    %v924 = vadd.f32 %v538, %v860
    %v925 = vadd.f32 %v539, %v861
    %v926 = vadd.f32 %v540, %v862
    %v927 = vadd.f32 %v541, %v863
    %v928 = vadd.f32 %v542, %v864
    %v929 = vadd.f32 %v543, %v865
    %v930 = vadd.f32 %v544, %v866
    %v931 = vadd.f32 %v545, %v867
    %v932 = vadd.f32 %v546, %v868
    %v933 = vadd.f32 %v547, %v869
    %v934 = vadd.f32 %v548, %v870
    %v935 = vadd.f32 %v549, %v871
    %v936 = vadd.f32 %v550, %v872
    %v937 = vadd.f32 %v551, %v873
    %v938 = vadd.f32 %v552, %v874
    %v939 = vadd.f32 %v553, %v875
    %v940 = vadd.f32 %v554, %v876
    %v941 = vadd.f32 %v555, %v877
    %v942 = vadd.f32 %v556, %v878
    %v943 = vadd.f32 %v557, %v879
    %v944 = vadd.f32 %v558, %v880
    %v945 = vadd.f32 %v559, %v881
    %v946 = vadd.f32 %v560, %v882
    %v947 = vadd.f32 %v561, %v883
    %v948 = vadd.f32 %v562, %v884
    %v949 = vadd.f32 %v563, %v885
    %v950 = vadd.f32 %v564, %v886
    %v951 = vadd.f32 %v565, %v887
    %v952 = vadd.f32 %v566, %v888
    %v953 = vadd.f32 %v567, %v889
    %v954 = vadd.f32 %v568, %v890
    %v955 = vadd.f32 %v569, %v891
    %v956 = vadd.f32 %v570, %v892
    %v957 = vadd.f32 %v571, %v893
    %v958 = vadd.f32 %v572, %v894
    %v959 = vadd.f32 %v573, %v895
    %v960 = vadd.f32 %v574, %v896
    %v961 = vadd.f32 %v575, %v897
    %v962 = vadd.f32 %v576, %v898
    %v963 = vadd.f32 %v577, %v899
    %v964 = vadd.f32 %v578, %v900
    %v965 = vadd.f32 %v579, %v901
    %v966 = vadd.f32 %v580, %v902
    %v967 = vadd.f32 %v581, %v903
    %v968 = vadd.f32 %v582, %v904
    %v969 = vadd.f32 %v583, %v905
    %v970 = vadd.f32 %v584, %v906
    %v971 = vadd.f32 %v585, %v907
    %v972 = vadd.f32 %v586, %v908
    %v973 = vadd.f32 %v587, %v909
    %v974 = vadd.f32 %v588, %v910
    %v975 = vadd.f32 %v589, %v911
    %v976 = vadd.f32 %v590, %v912
    %v977 = vadd.f32 %v591, %v913
    %v978 = vadd.f32 %v592, %v914
    %v979 = vadd.f32 %v593, %v915
    %v980 = vadd.f32 %v594, %v916
    %v981 = vadd.f32 %v595, %v917
    %v982 = vadd.f32 %v596, %v918
    %v983 = vadd.f32 %v597, %v919
    %v984 = vadd.f32 %v598, %v920
    %v985 = vadd.f32 %v599, %v921
    %v986 = vld [vmem:[%s1 + $0x2] sm:$0x1]
    %987 = vset.pattern.permute.xlu0 2
    %988 = vperm.xlu0 %987, %v82
    %v989 = vpop.permute.xlu0 %988
    %991 = vset.pattern.permute.xlu0 2
    %992 = vperm.xlu0 %991, %v83
    %v993 = vpop.permute.xlu0 %992
    %995 = vset.pattern.permute.xlu0 2
    %996 = vperm.xlu0 %995, %v84
    %v997 = vpop.permute.xlu0 %996
    %999 = vset.pattern.permute.xlu0 2
    %1000 = vperm.xlu0 %999, %v85
    %v1001 = vpop.permute.xlu0 %1000
    %1003 = vset.pattern.permute.xlu0 2
    %1004 = vperm.xlu0 %1003, %v86
    %v1005 = vpop.permute.xlu0 %1004
    %1007 = vset.pattern.permute.xlu0 2
    %1008 = vperm.xlu0 %1007, %v87
    %v1009 = vpop.permute.xlu0 %1008
    %1011 = vset.pattern.permute.xlu0 2
    %1012 = vperm.xlu0 %1011, %v88
    %v1013 = vpop.permute.xlu0 %1012
    %1015 = vset.pattern.permute.xlu0 2
    %1016 = vperm.xlu0 %1015, %v89
    %v1017 = vpop.permute.xlu0 %1016
    %1019 = vset.pattern.permute.xlu0 2
    %1020 = vperm.xlu0 %1019, %v90
    %v1021 = vpop.permute.xlu0 %1020
    %1023 = vset.pattern.permute.xlu0 2
    %1024 = vperm.xlu0 %1023, %v91
    %v1025 = vpop.permute.xlu0 %1024
    %1027 = vset.pattern.permute.xlu0 2
    %1028 = vperm.xlu0 %1027, %v92
    %v1029 = vpop.permute.xlu0 %1028
    %1031 = vset.pattern.permute.xlu0 2
    %1032 = vperm.xlu0 %1031, %v93
    %v1033 = vpop.permute.xlu0 %1032
    %1035 = vset.pattern.permute.xlu0 2
    %1036 = vperm.xlu0 %1035, %v94
    %v1037 = vpop.permute.xlu0 %1036
    %1039 = vset.pattern.permute.xlu0 2
    %1040 = vperm.xlu0 %1039, %v95
    %v1041 = vpop.permute.xlu0 %1040
    %1043 = vset.pattern.permute.xlu0 2
    %1044 = vperm.xlu0 %1043, %v96
    %v1045 = vpop.permute.xlu0 %1044
    %1047 = vset.pattern.permute.xlu0 2
    %1048 = vperm.xlu0 %1047, %v97
    %v1049 = vpop.permute.xlu0 %1048
    %1051 = vset.pattern.permute.xlu0 2
    %1052 = vperm.xlu0 %1051, %v98
    %v1053 = vpop.permute.xlu0 %1052
    %1055 = vset.pattern.permute.xlu0 2
    %1056 = vperm.xlu0 %1055, %v99
    %v1057 = vpop.permute.xlu0 %1056
    %1059 = vset.pattern.permute.xlu0 2
    %1060 = vperm.xlu0 %1059, %v100
    %v1061 = vpop.permute.xlu0 %1060
    %1063 = vset.pattern.permute.xlu0 2
    %1064 = vperm.xlu0 %1063, %v101
    %v1065 = vpop.permute.xlu0 %1064
    %1067 = vset.pattern.permute.xlu0 2
    %1068 = vperm.xlu0 %1067, %v102
    %v1069 = vpop.permute.xlu0 %1068
    %1071 = vset.pattern.permute.xlu0 2
    %1072 = vperm.xlu0 %1071, %v103
    %v1073 = vpop.permute.xlu0 %1072
    %1075 = vset.pattern.permute.xlu0 2
    %1076 = vperm.xlu0 %1075, %v104
    %v1077 = vpop.permute.xlu0 %1076
    %1079 = vset.pattern.permute.xlu0 2
    %1080 = vperm.xlu0 %1079, %v105
    %v1081 = vpop.permute.xlu0 %1080
    %1083 = vset.pattern.permute.xlu0 2
    %1084 = vperm.xlu0 %1083, %v106
    %v1085 = vpop.permute.xlu0 %1084
    %1087 = vset.pattern.permute.xlu0 2
    %1088 = vperm.xlu0 %1087, %v107
    %v1089 = vpop.permute.xlu0 %1088
    %1091 = vset.pattern.permute.xlu0 2
    %1092 = vperm.xlu0 %1091, %v108
    %v1093 = vpop.permute.xlu0 %1092
    %1095 = vset.pattern.permute.xlu0 2
    %1096 = vperm.xlu0 %1095, %v109
    %v1097 = vpop.permute.xlu0 %1096
    %1099 = vset.pattern.permute.xlu0 2
    %1100 = vperm.xlu0 %1099, %v110
    %v1101 = vpop.permute.xlu0 %1100
    %1103 = vset.pattern.permute.xlu0 2
    %1104 = vperm.xlu0 %1103, %v111
    %v1105 = vpop.permute.xlu0 %1104
    %1107 = vset.pattern.permute.xlu0 2
    %1108 = vperm.xlu0 %1107, %v112
    %v1109 = vpop.permute.xlu0 %1108
    %1111 = vset.pattern.permute.xlu0 2
    %1112 = vperm.xlu0 %1111, %v113
    %v1113 = vpop.permute.xlu0 %1112
    %1115 = vset.pattern.permute.xlu0 2
    %1116 = vperm.xlu0 %1115, %v114
    %v1117 = vpop.permute.xlu0 %1116
    %1119 = vset.pattern.permute.xlu0 2
    %1120 = vperm.xlu0 %1119, %v115
    %v1121 = vpop.permute.xlu0 %1120
    %1123 = vset.pattern.permute.xlu0 2
    %1124 = vperm.xlu0 %1123, %v116
    %v1125 = vpop.permute.xlu0 %1124
    %1127 = vset.pattern.permute.xlu0 2
    %1128 = vperm.xlu0 %1127, %v117
    %v1129 = vpop.permute.xlu0 %1128
    %1131 = vset.pattern.permute.xlu0 2
    %1132 = vperm.xlu0 %1131, %v118
    %v1133 = vpop.permute.xlu0 %1132
    %1135 = vset.pattern.permute.xlu0 2
    %1136 = vperm.xlu0 %1135, %v119
    %v1137 = vpop.permute.xlu0 %1136
    %1139 = vset.pattern.permute.xlu0 2
    %1140 = vperm.xlu0 %1139, %v120
    %v1141 = vpop.permute.xlu0 %1140
    %1143 = vset.pattern.permute.xlu0 2
    %1144 = vperm.xlu0 %1143, %v121
    %v1145 = vpop.permute.xlu0 %1144
    %1147 = vset.pattern.permute.xlu0 2
    %1148 = vperm.xlu0 %1147, %v122
    %v1149 = vpop.permute.xlu0 %1148
    %1151 = vset.pattern.permute.xlu0 2
    %1152 = vperm.xlu0 %1151, %v123
    %v1153 = vpop.permute.xlu0 %1152
    %1155 = vset.pattern.permute.xlu0 2
    %1156 = vperm.xlu0 %1155, %v124
    %v1157 = vpop.permute.xlu0 %1156
    %1159 = vset.pattern.permute.xlu0 2
    %1160 = vperm.xlu0 %1159, %v125
    %v1161 = vpop.permute.xlu0 %1160
    %1163 = vset.pattern.permute.xlu0 2
    %1164 = vperm.xlu0 %1163, %v126
    %v1165 = vpop.permute.xlu0 %1164
    %1167 = vset.pattern.permute.xlu0 2
    %1168 = vperm.xlu0 %1167, %v127
    %v1169 = vpop.permute.xlu0 %1168
    %1171 = vset.pattern.permute.xlu0 2
    %1172 = vperm.xlu0 %1171, %v128
    %v1173 = vpop.permute.xlu0 %1172
    %1175 = vset.pattern.permute.xlu0 2
    %1176 = vperm.xlu0 %1175, %v129
    %v1177 = vpop.permute.xlu0 %1176
    %1179 = vset.pattern.permute.xlu0 2
    %1180 = vperm.xlu0 %1179, %v130
    %v1181 = vpop.permute.xlu0 %1180
    %1183 = vset.pattern.permute.xlu0 2
    %1184 = vperm.xlu0 %1183, %v131
    %v1185 = vpop.permute.xlu0 %1184
    %1187 = vset.pattern.permute.xlu0 2
    %1188 = vperm.xlu0 %1187, %v132
    %v1189 = vpop.permute.xlu0 %1188
    %1191 = vset.pattern.permute.xlu0 2
    %1192 = vperm.xlu0 %1191, %v133
    %v1193 = vpop.permute.xlu0 %1192
    %1195 = vset.pattern.permute.xlu0 2
    %1196 = vperm.xlu0 %1195, %v134
    %v1197 = vpop.permute.xlu0 %1196
    %1199 = vset.pattern.permute.xlu0 2
    %1200 = vperm.xlu0 %1199, %v135
    %v1201 = vpop.permute.xlu0 %1200
    %1203 = vset.pattern.permute.xlu0 2
    %1204 = vperm.xlu0 %1203, %v136
    %v1205 = vpop.permute.xlu0 %1204
    %1207 = vset.pattern.permute.xlu0 2
    %1208 = vperm.xlu0 %1207, %v137
    %v1209 = vpop.permute.xlu0 %1208
    %1211 = vset.pattern.permute.xlu0 2
    %1212 = vperm.xlu0 %1211, %v138
    %v1213 = vpop.permute.xlu0 %1212
    %1215 = vset.pattern.permute.xlu0 2
    %1216 = vperm.xlu0 %1215, %v139
    %v1217 = vpop.permute.xlu0 %1216
    %1219 = vset.pattern.permute.xlu0 2
    %1220 = vperm.xlu0 %1219, %v140
    %v1221 = vpop.permute.xlu0 %1220
    %1223 = vset.pattern.permute.xlu0 2
    %1224 = vperm.xlu0 %1223, %v141
    %v1225 = vpop.permute.xlu0 %1224
    %1227 = vset.pattern.permute.xlu0 2
    %1228 = vperm.xlu0 %1227, %v142
    %v1229 = vpop.permute.xlu0 %1228
    %1231 = vset.pattern.permute.xlu0 2
    %1232 = vperm.xlu0 %1231, %v143
    %v1233 = vpop.permute.xlu0 %1232
    %1235 = vset.pattern.permute.xlu0 2
    %1236 = vperm.xlu0 %1235, %v144
    %v1237 = vpop.permute.xlu0 %1236
    %1239 = vset.pattern.permute.xlu0 2
    %1240 = vperm.xlu0 %1239, %v145
    %v1241 = vpop.permute.xlu0 %1240
    %v1243 = vperm.slane %v986, 0
    %v1244 = vmul.f32 %v989, %v1243
    %v1245 = vmul.f32 %v993, %v1243
    %v1246 = vmul.f32 %v997, %v1243
    %v1247 = vmul.f32 %v1001, %v1243
    %v1248 = vmul.f32 %v1005, %v1243
    %v1249 = vmul.f32 %v1009, %v1243
    %v1250 = vmul.f32 %v1013, %v1243
    %v1251 = vmul.f32 %v1017, %v1243
    %v1252 = vmul.f32 %v1021, %v1243
    %v1253 = vmul.f32 %v1025, %v1243
    %v1254 = vmul.f32 %v1029, %v1243
    %v1255 = vmul.f32 %v1033, %v1243
    %v1256 = vmul.f32 %v1037, %v1243
    %v1257 = vmul.f32 %v1041, %v1243
    %v1258 = vmul.f32 %v1045, %v1243
    %v1259 = vmul.f32 %v1049, %v1243
    %v1260 = vmul.f32 %v1053, %v1243
    %v1261 = vmul.f32 %v1057, %v1243
    %v1262 = vmul.f32 %v1061, %v1243
    %v1263 = vmul.f32 %v1065, %v1243
    %v1264 = vmul.f32 %v1069, %v1243
    %v1265 = vmul.f32 %v1073, %v1243
    %v1266 = vmul.f32 %v1077, %v1243
    %v1267 = vmul.f32 %v1081, %v1243
    %v1268 = vmul.f32 %v1085, %v1243
    %v1269 = vmul.f32 %v1089, %v1243
    %v1270 = vmul.f32 %v1093, %v1243
    %v1271 = vmul.f32 %v1097, %v1243
    %v1272 = vmul.f32 %v1101, %v1243
    %v1273 = vmul.f32 %v1105, %v1243
    %v1274 = vmul.f32 %v1109, %v1243
    %v1275 = vmul.f32 %v1113, %v1243
    %v1276 = vmul.f32 %v1117, %v1243
    %v1277 = vmul.f32 %v1121, %v1243
    %v1278 = vmul.f32 %v1125, %v1243
    %v1279 = vmul.f32 %v1129, %v1243
    %v1280 = vmul.f32 %v1133, %v1243
    %v1281 = vmul.f32 %v1137, %v1243
    %v1282 = vmul.f32 %v1141, %v1243
    %v1283 = vmul.f32 %v1145, %v1243
    %v1284 = vmul.f32 %v1149, %v1243
    %v1285 = vmul.f32 %v1153, %v1243
    %v1286 = vmul.f32 %v1157, %v1243
    %v1287 = vmul.f32 %v1161, %v1243
    %v1288 = vmul.f32 %v1165, %v1243
    %v1289 = vmul.f32 %v1169, %v1243
    %v1290 = vmul.f32 %v1173, %v1243
    %v1291 = vmul.f32 %v1177, %v1243
    %v1292 = vmul.f32 %v1181, %v1243
    %v1293 = vmul.f32 %v1185, %v1243
    %v1294 = vmul.f32 %v1189, %v1243
    %v1295 = vmul.f32 %v1193, %v1243
    %v1296 = vmul.f32 %v1197, %v1243
    %v1297 = vmul.f32 %v1201, %v1243
    %v1298 = vmul.f32 %v1205, %v1243
    %v1299 = vmul.f32 %v1209, %v1243
    %v1300 = vmul.f32 %v1213, %v1243
    %v1301 = vmul.f32 %v1217, %v1243
    %v1302 = vmul.f32 %v1221, %v1243
    %v1303 = vmul.f32 %v1225, %v1243
    %v1304 = vmul.f32 %v1229, %v1243
    %v1305 = vmul.f32 %v1233, %v1243
    %v1306 = vmul.f32 %v1237, %v1243
    %v1307 = vmul.f32 %v1241, %v1243
    %v1308 = vadd.f32 %v922, %v1244
    %v1309 = vadd.f32 %v923, %v1245
    %v1310 = vadd.f32 %v924, %v1246
    %v1311 = vadd.f32 %v925, %v1247
    %v1312 = vadd.f32 %v926, %v1248
    %v1313 = vadd.f32 %v927, %v1249
    %v1314 = vadd.f32 %v928, %v1250
    %v1315 = vadd.f32 %v929, %v1251
    %v1316 = vadd.f32 %v930, %v1252
    %v1317 = vadd.f32 %v931, %v1253
    %v1318 = vadd.f32 %v932, %v1254
    %v1319 = vadd.f32 %v933, %v1255
    %v1320 = vadd.f32 %v934, %v1256
    %v1321 = vadd.f32 %v935, %v1257
    %v1322 = vadd.f32 %v936, %v1258
    %v1323 = vadd.f32 %v937, %v1259
    %v1324 = vadd.f32 %v938, %v1260
    %v1325 = vadd.f32 %v939, %v1261
    %v1326 = vadd.f32 %v940, %v1262
    %v1327 = vadd.f32 %v941, %v1263
    %v1328 = vadd.f32 %v942, %v1264
    %v1329 = vadd.f32 %v943, %v1265
    %v1330 = vadd.f32 %v944, %v1266
    %v1331 = vadd.f32 %v945, %v1267
    %v1332 = vadd.f32 %v946, %v1268
    %v1333 = vadd.f32 %v947, %v1269
    %v1334 = vadd.f32 %v948, %v1270
    %v1335 = vadd.f32 %v949, %v1271
    %v1336 = vadd.f32 %v950, %v1272
    %v1337 = vadd.f32 %v951, %v1273
    %v1338 = vadd.f32 %v952, %v1274
    %v1339 = vadd.f32 %v953, %v1275
    %v1340 = vadd.f32 %v954, %v1276
    %v1341 = vadd.f32 %v955, %v1277
    %v1342 = vadd.f32 %v956, %v1278
    %v1343 = vadd.f32 %v957, %v1279
    %v1344 = vadd.f32 %v958, %v1280
    %v1345 = vadd.f32 %v959, %v1281
    %v1346 = vadd.f32 %v960, %v1282
    %v1347 = vadd.f32 %v961, %v1283
    %v1348 = vadd.f32 %v962, %v1284
    %v1349 = vadd.f32 %v963, %v1285
    %v1350 = vadd.f32 %v964, %v1286
    %v1351 = vadd.f32 %v965, %v1287
    %v1352 = vadd.f32 %v966, %v1288
    %v1353 = vadd.f32 %v967, %v1289
    %v1354 = vadd.f32 %v968, %v1290
    %v1355 = vadd.f32 %v969, %v1291
    %v1356 = vadd.f32 %v970, %v1292
    %v1357 = vadd.f32 %v971, %v1293
    %v1358 = vadd.f32 %v972, %v1294
    %v1359 = vadd.f32 %v973, %v1295
    %v1360 = vadd.f32 %v974, %v1296
    %v1361 = vadd.f32 %v975, %v1297
    %v1362 = vadd.f32 %v976, %v1298
    %v1363 = vadd.f32 %v977, %v1299
    %v1364 = vadd.f32 %v978, %v1300
    %v1365 = vadd.f32 %v979, %v1301
    %v1366 = vadd.f32 %v980, %v1302
    %v1367 = vadd.f32 %v981, %v1303
    %v1368 = vadd.f32 %v982, %v1304
    %v1369 = vadd.f32 %v983, %v1305
    %v1370 = vadd.f32 %v984, %v1306
    %v1371 = vadd.f32 %v985, %v1307
    %v1372 = vld [vmem:[%s1 + $0x3] sm:$0x1]
    %1373 = vset.pattern.permute.xlu0 3
    %1374 = vperm.xlu0 %1373, %v82
    %v1375 = vpop.permute.xlu0 %1374
    %1377 = vset.pattern.permute.xlu0 3
    %1378 = vperm.xlu0 %1377, %v83
    %v1379 = vpop.permute.xlu0 %1378
    %1381 = vset.pattern.permute.xlu0 3
    %1382 = vperm.xlu0 %1381, %v84
    %v1383 = vpop.permute.xlu0 %1382
    %1385 = vset.pattern.permute.xlu0 3
    %1386 = vperm.xlu0 %1385, %v85
    %v1387 = vpop.permute.xlu0 %1386
    %1389 = vset.pattern.permute.xlu0 3
    %1390 = vperm.xlu0 %1389, %v86
    %v1391 = vpop.permute.xlu0 %1390
    %1393 = vset.pattern.permute.xlu0 3
    %1394 = vperm.xlu0 %1393, %v87
    %v1395 = vpop.permute.xlu0 %1394
    %1397 = vset.pattern.permute.xlu0 3
    %1398 = vperm.xlu0 %1397, %v88
    %v1399 = vpop.permute.xlu0 %1398
    %1401 = vset.pattern.permute.xlu0 3
    %1402 = vperm.xlu0 %1401, %v89
    %v1403 = vpop.permute.xlu0 %1402
    %1405 = vset.pattern.permute.xlu0 3
    %1406 = vperm.xlu0 %1405, %v90
    %v1407 = vpop.permute.xlu0 %1406
    %1409 = vset.pattern.permute.xlu0 3
    %1410 = vperm.xlu0 %1409, %v91
    %v1411 = vpop.permute.xlu0 %1410
    %1413 = vset.pattern.permute.xlu0 3
    %1414 = vperm.xlu0 %1413, %v92
    %v1415 = vpop.permute.xlu0 %1414
    %1417 = vset.pattern.permute.xlu0 3
    %1418 = vperm.xlu0 %1417, %v93
    %v1419 = vpop.permute.xlu0 %1418
    %1421 = vset.pattern.permute.xlu0 3
    %1422 = vperm.xlu0 %1421, %v94
    %v1423 = vpop.permute.xlu0 %1422
    %1425 = vset.pattern.permute.xlu0 3
    %1426 = vperm.xlu0 %1425, %v95
    %v1427 = vpop.permute.xlu0 %1426
    %1429 = vset.pattern.permute.xlu0 3
    %1430 = vperm.xlu0 %1429, %v96
    %v1431 = vpop.permute.xlu0 %1430
    %1433 = vset.pattern.permute.xlu0 3
    %1434 = vperm.xlu0 %1433, %v97
    %v1435 = vpop.permute.xlu0 %1434
    %1437 = vset.pattern.permute.xlu0 3
    %1438 = vperm.xlu0 %1437, %v98
    %v1439 = vpop.permute.xlu0 %1438
    %1441 = vset.pattern.permute.xlu0 3
    %1442 = vperm.xlu0 %1441, %v99
    %v1443 = vpop.permute.xlu0 %1442
    %1445 = vset.pattern.permute.xlu0 3
    %1446 = vperm.xlu0 %1445, %v100
    %v1447 = vpop.permute.xlu0 %1446
    %1449 = vset.pattern.permute.xlu0 3
    %1450 = vperm.xlu0 %1449, %v101
    %v1451 = vpop.permute.xlu0 %1450
    %1453 = vset.pattern.permute.xlu0 3
    %1454 = vperm.xlu0 %1453, %v102
    %v1455 = vpop.permute.xlu0 %1454
    %1457 = vset.pattern.permute.xlu0 3
    %1458 = vperm.xlu0 %1457, %v103
    %v1459 = vpop.permute.xlu0 %1458
    %1461 = vset.pattern.permute.xlu0 3
    %1462 = vperm.xlu0 %1461, %v104
    %v1463 = vpop.permute.xlu0 %1462
    %1465 = vset.pattern.permute.xlu0 3
    %1466 = vperm.xlu0 %1465, %v105
    %v1467 = vpop.permute.xlu0 %1466
    %1469 = vset.pattern.permute.xlu0 3
    %1470 = vperm.xlu0 %1469, %v106
    %v1471 = vpop.permute.xlu0 %1470
    %1473 = vset.pattern.permute.xlu0 3
    %1474 = vperm.xlu0 %1473, %v107
    %v1475 = vpop.permute.xlu0 %1474
    %1477 = vset.pattern.permute.xlu0 3
    %1478 = vperm.xlu0 %1477, %v108
    %v1479 = vpop.permute.xlu0 %1478
    %1481 = vset.pattern.permute.xlu0 3
    %1482 = vperm.xlu0 %1481, %v109
    %v1483 = vpop.permute.xlu0 %1482
    %1485 = vset.pattern.permute.xlu0 3
    %1486 = vperm.xlu0 %1485, %v110
    %v1487 = vpop.permute.xlu0 %1486
    %1489 = vset.pattern.permute.xlu0 3
    %1490 = vperm.xlu0 %1489, %v111
    %v1491 = vpop.permute.xlu0 %1490
    %1493 = vset.pattern.permute.xlu0 3
    %1494 = vperm.xlu0 %1493, %v112
    %v1495 = vpop.permute.xlu0 %1494
    %1497 = vset.pattern.permute.xlu0 3
    %1498 = vperm.xlu0 %1497, %v113
    %v1499 = vpop.permute.xlu0 %1498
    %1501 = vset.pattern.permute.xlu0 3
    %1502 = vperm.xlu0 %1501, %v114
    %v1503 = vpop.permute.xlu0 %1502
    %1505 = vset.pattern.permute.xlu0 3
    %1506 = vperm.xlu0 %1505, %v115
    %v1507 = vpop.permute.xlu0 %1506
    %1509 = vset.pattern.permute.xlu0 3
    %1510 = vperm.xlu0 %1509, %v116
    %v1511 = vpop.permute.xlu0 %1510
    %1513 = vset.pattern.permute.xlu0 3
    %1514 = vperm.xlu0 %1513, %v117
    %v1515 = vpop.permute.xlu0 %1514
    %1517 = vset.pattern.permute.xlu0 3
    %1518 = vperm.xlu0 %1517, %v118
    %v1519 = vpop.permute.xlu0 %1518
    %1521 = vset.pattern.permute.xlu0 3
    %1522 = vperm.xlu0 %1521, %v119
    %v1523 = vpop.permute.xlu0 %1522
    %1525 = vset.pattern.permute.xlu0 3
    %1526 = vperm.xlu0 %1525, %v120
    %v1527 = vpop.permute.xlu0 %1526
    %1529 = vset.pattern.permute.xlu0 3
    %1530 = vperm.xlu0 %1529, %v121
    %v1531 = vpop.permute.xlu0 %1530
    %1533 = vset.pattern.permute.xlu0 3
    %1534 = vperm.xlu0 %1533, %v122
    %v1535 = vpop.permute.xlu0 %1534
    %1537 = vset.pattern.permute.xlu0 3
    %1538 = vperm.xlu0 %1537, %v123
    %v1539 = vpop.permute.xlu0 %1538
    %1541 = vset.pattern.permute.xlu0 3
    %1542 = vperm.xlu0 %1541, %v124
    %v1543 = vpop.permute.xlu0 %1542
    %1545 = vset.pattern.permute.xlu0 3
    %1546 = vperm.xlu0 %1545, %v125
    %v1547 = vpop.permute.xlu0 %1546
    %1549 = vset.pattern.permute.xlu0 3
    %1550 = vperm.xlu0 %1549, %v126
    %v1551 = vpop.permute.xlu0 %1550
    %1553 = vset.pattern.permute.xlu0 3
    %1554 = vperm.xlu0 %1553, %v127
    %v1555 = vpop.permute.xlu0 %1554
    %1557 = vset.pattern.permute.xlu0 3
    %1558 = vperm.xlu0 %1557, %v128
    %v1559 = vpop.permute.xlu0 %1558
    %1561 = vset.pattern.permute.xlu0 3
    %1562 = vperm.xlu0 %1561, %v129
    %v1563 = vpop.permute.xlu0 %1562
    %1565 = vset.pattern.permute.xlu0 3
    %1566 = vperm.xlu0 %1565, %v130
    %v1567 = vpop.permute.xlu0 %1566
    %1569 = vset.pattern.permute.xlu0 3
    %1570 = vperm.xlu0 %1569, %v131
    %v1571 = vpop.permute.xlu0 %1570
    %1573 = vset.pattern.permute.xlu0 3
    %1574 = vperm.xlu0 %1573, %v132
    %v1575 = vpop.permute.xlu0 %1574
    %1577 = vset.pattern.permute.xlu0 3
    %1578 = vperm.xlu0 %1577, %v133
    %v1579 = vpop.permute.xlu0 %1578
    %1581 = vset.pattern.permute.xlu0 3
    %1582 = vperm.xlu0 %1581, %v134
    %v1583 = vpop.permute.xlu0 %1582
    %1585 = vset.pattern.permute.xlu0 3
    %1586 = vperm.xlu0 %1585, %v135
    %v1587 = vpop.permute.xlu0 %1586
    %1589 = vset.pattern.permute.xlu0 3
    %1590 = vperm.xlu0 %1589, %v136
    %v1591 = vpop.permute.xlu0 %1590
    %1593 = vset.pattern.permute.xlu0 3
    %1594 = vperm.xlu0 %1593, %v137
    %v1595 = vpop.permute.xlu0 %1594
    %1597 = vset.pattern.permute.xlu0 3
    %1598 = vperm.xlu0 %1597, %v138
    %v1599 = vpop.permute.xlu0 %1598
    %1601 = vset.pattern.permute.xlu0 3
    %1602 = vperm.xlu0 %1601, %v139
    %v1603 = vpop.permute.xlu0 %1602
    %1605 = vset.pattern.permute.xlu0 3
    %1606 = vperm.xlu0 %1605, %v140
    %v1607 = vpop.permute.xlu0 %1606
    %1609 = vset.pattern.permute.xlu0 3
    %1610 = vperm.xlu0 %1609, %v141
    %v1611 = vpop.permute.xlu0 %1610
    %1613 = vset.pattern.permute.xlu0 3
    %1614 = vperm.xlu0 %1613, %v142
    %v1615 = vpop.permute.xlu0 %1614
    %1617 = vset.pattern.permute.xlu0 3
    %1618 = vperm.xlu0 %1617, %v143
    %v1619 = vpop.permute.xlu0 %1618
    %1621 = vset.pattern.permute.xlu0 3
    %1622 = vperm.xlu0 %1621, %v144
    %v1623 = vpop.permute.xlu0 %1622
    %1625 = vset.pattern.permute.xlu0 3
    %1626 = vperm.xlu0 %1625, %v145
    %v1627 = vpop.permute.xlu0 %1626
    %v1629 = vperm.slane %v1372, 0
    %v1630 = vmul.f32 %v1375, %v1629
    %v1631 = vmul.f32 %v1379, %v1629
    %v1632 = vmul.f32 %v1383, %v1629
    %v1633 = vmul.f32 %v1387, %v1629
    %v1634 = vmul.f32 %v1391, %v1629
    %v1635 = vmul.f32 %v1395, %v1629
    %v1636 = vmul.f32 %v1399, %v1629
    %v1637 = vmul.f32 %v1403, %v1629
    %v1638 = vmul.f32 %v1407, %v1629
    %v1639 = vmul.f32 %v1411, %v1629
    %v1640 = vmul.f32 %v1415, %v1629
    %v1641 = vmul.f32 %v1419, %v1629
    %v1642 = vmul.f32 %v1423, %v1629
    %v1643 = vmul.f32 %v1427, %v1629
    %v1644 = vmul.f32 %v1431, %v1629
    %v1645 = vmul.f32 %v1435, %v1629
    %v1646 = vmul.f32 %v1439, %v1629
    %v1647 = vmul.f32 %v1443, %v1629
    %v1648 = vmul.f32 %v1447, %v1629
    %v1649 = vmul.f32 %v1451, %v1629
    %v1650 = vmul.f32 %v1455, %v1629
    %v1651 = vmul.f32 %v1459, %v1629
    %v1652 = vmul.f32 %v1463, %v1629
    %v1653 = vmul.f32 %v1467, %v1629
    %v1654 = vmul.f32 %v1471, %v1629
    %v1655 = vmul.f32 %v1475, %v1629
    %v1656 = vmul.f32 %v1479, %v1629
    %v1657 = vmul.f32 %v1483, %v1629
    %v1658 = vmul.f32 %v1487, %v1629
    %v1659 = vmul.f32 %v1491, %v1629
    %v1660 = vmul.f32 %v1495, %v1629
    %v1661 = vmul.f32 %v1499, %v1629
    %v1662 = vmul.f32 %v1503, %v1629
    %v1663 = vmul.f32 %v1507, %v1629
    %v1664 = vmul.f32 %v1511, %v1629
    %v1665 = vmul.f32 %v1515, %v1629
    %v1666 = vmul.f32 %v1519, %v1629
    %v1667 = vmul.f32 %v1523, %v1629
    %v1668 = vmul.f32 %v1527, %v1629
    %v1669 = vmul.f32 %v1531, %v1629
    %v1670 = vmul.f32 %v1535, %v1629
    %v1671 = vmul.f32 %v1539, %v1629
    %v1672 = vmul.f32 %v1543, %v1629
    %v1673 = vmul.f32 %v1547, %v1629
    %v1674 = vmul.f32 %v1551, %v1629
    %v1675 = vmul.f32 %v1555, %v1629
    %v1676 = vmul.f32 %v1559, %v1629
    %v1677 = vmul.f32 %v1563, %v1629
    %v1678 = vmul.f32 %v1567, %v1629
    %v1679 = vmul.f32 %v1571, %v1629
    %v1680 = vmul.f32 %v1575, %v1629
    %v1681 = vmul.f32 %v1579, %v1629
    %v1682 = vmul.f32 %v1583, %v1629
    %v1683 = vmul.f32 %v1587, %v1629
    %v1684 = vmul.f32 %v1591, %v1629
    %v1685 = vmul.f32 %v1595, %v1629
    %v1686 = vmul.f32 %v1599, %v1629
    %v1687 = vmul.f32 %v1603, %v1629
    %v1688 = vmul.f32 %v1607, %v1629
    %v1689 = vmul.f32 %v1611, %v1629
    %v1690 = vmul.f32 %v1615, %v1629
    %v1691 = vmul.f32 %v1619, %v1629
    %v1692 = vmul.f32 %v1623, %v1629
    %v1693 = vmul.f32 %v1627, %v1629
    %v1694 = vadd.f32 %v1308, %v1630
    %v1695 = vadd.f32 %v1309, %v1631
    %v1696 = vadd.f32 %v1310, %v1632
    %v1697 = vadd.f32 %v1311, %v1633
    %v1698 = vadd.f32 %v1312, %v1634
    %v1699 = vadd.f32 %v1313, %v1635
    %v1700 = vadd.f32 %v1314, %v1636
    %v1701 = vadd.f32 %v1315, %v1637
    %v1702 = vadd.f32 %v1316, %v1638
    %v1703 = vadd.f32 %v1317, %v1639
    %v1704 = vadd.f32 %v1318, %v1640
    %v1705 = vadd.f32 %v1319, %v1641
    %v1706 = vadd.f32 %v1320, %v1642
    %v1707 = vadd.f32 %v1321, %v1643
    %v1708 = vadd.f32 %v1322, %v1644
    %v1709 = vadd.f32 %v1323, %v1645
    %v1710 = vadd.f32 %v1324, %v1646
    %v1711 = vadd.f32 %v1325, %v1647
    %v1712 = vadd.f32 %v1326, %v1648
    %v1713 = vadd.f32 %v1327, %v1649
    %v1714 = vadd.f32 %v1328, %v1650
    %v1715 = vadd.f32 %v1329, %v1651
    %v1716 = vadd.f32 %v1330, %v1652
    %v1717 = vadd.f32 %v1331, %v1653
    %v1718 = vadd.f32 %v1332, %v1654
    %v1719 = vadd.f32 %v1333, %v1655
    %v1720 = vadd.f32 %v1334, %v1656
    %v1721 = vadd.f32 %v1335, %v1657
    %v1722 = vadd.f32 %v1336, %v1658
    %v1723 = vadd.f32 %v1337, %v1659
    %v1724 = vadd.f32 %v1338, %v1660
    %v1725 = vadd.f32 %v1339, %v1661
    %v1726 = vadd.f32 %v1340, %v1662
    %v1727 = vadd.f32 %v1341, %v1663
    %v1728 = vadd.f32 %v1342, %v1664
    %v1729 = vadd.f32 %v1343, %v1665
    %v1730 = vadd.f32 %v1344, %v1666
    %v1731 = vadd.f32 %v1345, %v1667
    %v1732 = vadd.f32 %v1346, %v1668
    %v1733 = vadd.f32 %v1347, %v1669
    %v1734 = vadd.f32 %v1348, %v1670
    %v1735 = vadd.f32 %v1349, %v1671
    %v1736 = vadd.f32 %v1350, %v1672
    %v1737 = vadd.f32 %v1351, %v1673
    %v1738 = vadd.f32 %v1352, %v1674
    %v1739 = vadd.f32 %v1353, %v1675
    %v1740 = vadd.f32 %v1354, %v1676
    %v1741 = vadd.f32 %v1355, %v1677
    %v1742 = vadd.f32 %v1356, %v1678
    %v1743 = vadd.f32 %v1357, %v1679
    %v1744 = vadd.f32 %v1358, %v1680
    %v1745 = vadd.f32 %v1359, %v1681
    %v1746 = vadd.f32 %v1360, %v1682
    %v1747 = vadd.f32 %v1361, %v1683
    %v1748 = vadd.f32 %v1362, %v1684
    %v1749 = vadd.f32 %v1363, %v1685
    %v1750 = vadd.f32 %v1364, %v1686
    %v1751 = vadd.f32 %v1365, %v1687
    %v1752 = vadd.f32 %v1366, %v1688
    %v1753 = vadd.f32 %v1367, %v1689
    %v1754 = vadd.f32 %v1368, %v1690
    %v1755 = vadd.f32 %v1369, %v1691
    %v1756 = vadd.f32 %v1370, %v1692
    %v1757 = vadd.f32 %v1371, %v1693
    %vm1758 = vcmp.gt.f32.partialorder %v1694, 0.0
    %vm1759 = vcmp.gt.f32.partialorder %v1695, 0.0
    %vm1760 = vcmp.gt.f32.partialorder %v1696, 0.0
    %vm1761 = vcmp.gt.f32.partialorder %v1697, 0.0
    %vm1762 = vcmp.gt.f32.partialorder %v1698, 0.0
    %vm1763 = vcmp.gt.f32.partialorder %v1699, 0.0
    %vm1764 = vcmp.gt.f32.partialorder %v1700, 0.0
    %vm1765 = vcmp.gt.f32.partialorder %v1701, 0.0
    %vm1766 = vcmp.gt.f32.partialorder %v1702, 0.0
    %vm1767 = vcmp.gt.f32.partialorder %v1703, 0.0
    %vm1768 = vcmp.gt.f32.partialorder %v1704, 0.0
    %vm1769 = vcmp.gt.f32.partialorder %v1705, 0.0
    %vm1770 = vcmp.gt.f32.partialorder %v1706, 0.0
    %vm1771 = vcmp.gt.f32.partialorder %v1707, 0.0
    %vm1772 = vcmp.gt.f32.partialorder %v1708, 0.0
    %vm1773 = vcmp.gt.f32.partialorder %v1709, 0.0
    %vm1774 = vcmp.gt.f32.partialorder %v1710, 0.0
    %vm1775 = vcmp.gt.f32.partialorder %v1711, 0.0
    %vm1776 = vcmp.gt.f32.partialorder %v1712, 0.0
    %vm1777 = vcmp.gt.f32.partialorder %v1713, 0.0
    %vm1778 = vcmp.gt.f32.partialorder %v1714, 0.0
    %vm1779 = vcmp.gt.f32.partialorder %v1715, 0.0
    %vm1780 = vcmp.gt.f32.partialorder %v1716, 0.0
    %vm1781 = vcmp.gt.f32.partialorder %v1717, 0.0
    %vm1782 = vcmp.gt.f32.partialorder %v1718, 0.0
    %vm1783 = vcmp.gt.f32.partialorder %v1719, 0.0
    %vm1784 = vcmp.gt.f32.partialorder %v1720, 0.0
    %vm1785 = vcmp.gt.f32.partialorder %v1721, 0.0
    %vm1786 = vcmp.gt.f32.partialorder %v1722, 0.0
    %vm1787 = vcmp.gt.f32.partialorder %v1723, 0.0
    %vm1788 = vcmp.gt.f32.partialorder %v1724, 0.0
    %vm1789 = vcmp.gt.f32.partialorder %v1725, 0.0
    %vm1790 = vcmp.gt.f32.partialorder %v1726, 0.0
    %vm1791 = vcmp.gt.f32.partialorder %v1727, 0.0
    %vm1792 = vcmp.gt.f32.partialorder %v1728, 0.0
    %vm1793 = vcmp.gt.f32.partialorder %v1729, 0.0
    %vm1794 = vcmp.gt.f32.partialorder %v1730, 0.0
    %vm1795 = vcmp.gt.f32.partialorder %v1731, 0.0
    %vm1796 = vcmp.gt.f32.partialorder %v1732, 0.0
    %vm1797 = vcmp.gt.f32.partialorder %v1733, 0.0
    %vm1798 = vcmp.gt.f32.partialorder %v1734, 0.0
    %vm1799 = vcmp.gt.f32.partialorder %v1735, 0.0
    %vm1800 = vcmp.gt.f32.partialorder %v1736, 0.0
    %vm1801 = vcmp.gt.f32.partialorder %v1737, 0.0
    %vm1802 = vcmp.gt.f32.partialorder %v1738, 0.0
    %vm1803 = vcmp.gt.f32.partialorder %v1739, 0.0
    %vm1804 = vcmp.gt.f32.partialorder %v1740, 0.0
    %vm1805 = vcmp.gt.f32.partialorder %v1741, 0.0
    %vm1806 = vcmp.gt.f32.partialorder %v1742, 0.0
    %vm1807 = vcmp.gt.f32.partialorder %v1743, 0.0
    %vm1808 = vcmp.gt.f32.partialorder %v1744, 0.0
    %vm1809 = vcmp.gt.f32.partialorder %v1745, 0.0
    %vm1810 = vcmp.gt.f32.partialorder %v1746, 0.0
    %vm1811 = vcmp.gt.f32.partialorder %v1747, 0.0
    %vm1812 = vcmp.gt.f32.partialorder %v1748, 0.0
    %vm1813 = vcmp.gt.f32.partialorder %v1749, 0.0
    %vm1814 = vcmp.gt.f32.partialorder %v1750, 0.0
    %vm1815 = vcmp.gt.f32.partialorder %v1751, 0.0
    %vm1816 = vcmp.gt.f32.partialorder %v1752, 0.0
    %vm1817 = vcmp.gt.f32.partialorder %v1753, 0.0
    %vm1818 = vcmp.gt.f32.partialorder %v1754, 0.0
    %vm1819 = vcmp.gt.f32.partialorder %v1755, 0.0
    %vm1820 = vcmp.gt.f32.partialorder %v1756, 0.0
    %vm1821 = vcmp.gt.f32.partialorder %v1757, 0.0
    %v1822 = vmul.f32 %v1694, 0.2
    %v1823 = vmul.f32 %v1695, 0.2
    %v1824 = vmul.f32 %v1696, 0.2
    %v1825 = vmul.f32 %v1697, 0.2
    %v1826 = vmul.f32 %v1698, 0.2
    %v1827 = vmul.f32 %v1699, 0.2
    %v1828 = vmul.f32 %v1700, 0.2
    %v1829 = vmul.f32 %v1701, 0.2
    %v1830 = vmul.f32 %v1702, 0.2
    %v1831 = vmul.f32 %v1703, 0.2
    %v1832 = vmul.f32 %v1704, 0.2
    %v1833 = vmul.f32 %v1705, 0.2
    %v1834 = vmul.f32 %v1706, 0.2
    %v1835 = vmul.f32 %v1707, 0.2
    %v1836 = vmul.f32 %v1708, 0.2
    %v1837 = vmul.f32 %v1709, 0.2
    %v1838 = vmul.f32 %v1710, 0.2
    %v1839 = vmul.f32 %v1711, 0.2
    %v1840 = vmul.f32 %v1712, 0.2
    %v1841 = vmul.f32 %v1713, 0.2
    %v1842 = vmul.f32 %v1714, 0.2
    %v1843 = vmul.f32 %v1715, 0.2
    %v1844 = vmul.f32 %v1716, 0.2
    %v1845 = vmul.f32 %v1717, 0.2
    %v1846 = vmul.f32 %v1718, 0.2
    %v1847 = vmul.f32 %v1719, 0.2
    %v1848 = vmul.f32 %v1720, 0.2
    %v1849 = vmul.f32 %v1721, 0.2
    %v1850 = vmul.f32 %v1722, 0.2
    %v1851 = vmul.f32 %v1723, 0.2
    %v1852 = vmul.f32 %v1724, 0.2
    %v1853 = vmul.f32 %v1725, 0.2
    %v1854 = vmul.f32 %v1726, 0.2
    %v1855 = vmul.f32 %v1727, 0.2
    %v1856 = vmul.f32 %v1728, 0.2
    %v1857 = vmul.f32 %v1729, 0.2
    %v1858 = vmul.f32 %v1730, 0.2
    %v1859 = vmul.f32 %v1731, 0.2
    %v1860 = vmul.f32 %v1732, 0.2
    %v1861 = vmul.f32 %v1733, 0.2
    %v1862 = vmul.f32 %v1734, 0.2
    %v1863 = vmul.f32 %v1735, 0.2
    %v1864 = vmul.f32 %v1736, 0.2
    %v1865 = vmul.f32 %v1737, 0.2
    %v1866 = vmul.f32 %v1738, 0.2
    %v1867 = vmul.f32 %v1739, 0.2
    %v1868 = vmul.f32 %v1740, 0.2
    %v1869 = vmul.f32 %v1741, 0.2
    %v1870 = vmul.f32 %v1742, 0.2
    %v1871 = vmul.f32 %v1743, 0.2
    %v1872 = vmul.f32 %v1744, 0.2
    %v1873 = vmul.f32 %v1745, 0.2
    %v1874 = vmul.f32 %v1746, 0.2
    %v1875 = vmul.f32 %v1747, 0.2
    %v1876 = vmul.f32 %v1748, 0.2
    %v1877 = vmul.f32 %v1749, 0.2
    %v1878 = vmul.f32 %v1750, 0.2
    %v1879 = vmul.f32 %v1751, 0.2
    %v1880 = vmul.f32 %v1752, 0.2
    %v1881 = vmul.f32 %v1753, 0.2
    %v1882 = vmul.f32 %v1754, 0.2
    %v1883 = vmul.f32 %v1755, 0.2
    %v1884 = vmul.f32 %v1756, 0.2
    %v1885 = vmul.f32 %v1757, 0.2
    %v1886 = vsel %vm1758, %v1694, %v1822
    %v1887 = vsel %vm1759, %v1695, %v1823
    %v1888 = vsel %vm1760, %v1696, %v1824
    %v1889 = vsel %vm1761, %v1697, %v1825
    %v1890 = vsel %vm1762, %v1698, %v1826
    %v1891 = vsel %vm1763, %v1699, %v1827
    %v1892 = vsel %vm1764, %v1700, %v1828
    %v1893 = vsel %vm1765, %v1701, %v1829
    %v1894 = vsel %vm1766, %v1702, %v1830
    %v1895 = vsel %vm1767, %v1703, %v1831
    %v1896 = vsel %vm1768, %v1704, %v1832
    %v1897 = vsel %vm1769, %v1705, %v1833
    %v1898 = vsel %vm1770, %v1706, %v1834
    %v1899 = vsel %vm1771, %v1707, %v1835
    %v1900 = vsel %vm1772, %v1708, %v1836
    %v1901 = vsel %vm1773, %v1709, %v1837
    %v1902 = vsel %vm1774, %v1710, %v1838
    %v1903 = vsel %vm1775, %v1711, %v1839
    %v1904 = vsel %vm1776, %v1712, %v1840
    %v1905 = vsel %vm1777, %v1713, %v1841
    %v1906 = vsel %vm1778, %v1714, %v1842
    %v1907 = vsel %vm1779, %v1715, %v1843
    %v1908 = vsel %vm1780, %v1716, %v1844
    %v1909 = vsel %vm1781, %v1717, %v1845
    %v1910 = vsel %vm1782, %v1718, %v1846
    %v1911 = vsel %vm1783, %v1719, %v1847
    %v1912 = vsel %vm1784, %v1720, %v1848
    %v1913 = vsel %vm1785, %v1721, %v1849
    %v1914 = vsel %vm1786, %v1722, %v1850
    %v1915 = vsel %vm1787, %v1723, %v1851
    %v1916 = vsel %vm1788, %v1724, %v1852
    %v1917 = vsel %vm1789, %v1725, %v1853
    %v1918 = vsel %vm1790, %v1726, %v1854
    %v1919 = vsel %vm1791, %v1727, %v1855
    %v1920 = vsel %vm1792, %v1728, %v1856
    %v1921 = vsel %vm1793, %v1729, %v1857
    %v1922 = vsel %vm1794, %v1730, %v1858
    %v1923 = vsel %vm1795, %v1731, %v1859
    %v1924 = vsel %vm1796, %v1732, %v1860
    %v1925 = vsel %vm1797, %v1733, %v1861
    %v1926 = vsel %vm1798, %v1734, %v1862
    %v1927 = vsel %vm1799, %v1735, %v1863
    %v1928 = vsel %vm1800, %v1736, %v1864
    %v1929 = vsel %vm1801, %v1737, %v1865
    %v1930 = vsel %vm1802, %v1738, %v1866
    %v1931 = vsel %vm1803, %v1739, %v1867
    %v1932 = vsel %vm1804, %v1740, %v1868
    %v1933 = vsel %vm1805, %v1741, %v1869
    %v1934 = vsel %vm1806, %v1742, %v1870
    %v1935 = vsel %vm1807, %v1743, %v1871
    %v1936 = vsel %vm1808, %v1744, %v1872
    %v1937 = vsel %vm1809, %v1745, %v1873
    %v1938 = vsel %vm1810, %v1746, %v1874
    %v1939 = vsel %vm1811, %v1747, %v1875
    %v1940 = vsel %vm1812, %v1748, %v1876
    %v1941 = vsel %vm1813, %v1749, %v1877
    %v1942 = vsel %vm1814, %v1750, %v1878
    %v1943 = vsel %vm1815, %v1751, %v1879
    %v1944 = vsel %vm1816, %v1752, %v1880
    %v1945 = vsel %vm1817, %v1753, %v1881
    %v1946 = vsel %vm1818, %v1754, %v1882
    %v1947 = vsel %vm1819, %v1755, %v1883
    %v1948 = vsel %vm1820, %v1756, %v1884
    %v1949 = vsel %vm1821, %v1757, %v1885
    %v1950 = vpack.c.bf16 %v1887, %v1886
    %v1951 = vpack.c.bf16 %v1889, %v1888
    %v1952 = vpack.c.bf16 %v1891, %v1890
    %v1953 = vpack.c.bf16 %v1893, %v1892
    %v1954 = vpack.c.bf16 %v1895, %v1894
    %v1955 = vpack.c.bf16 %v1897, %v1896
    %v1956 = vpack.c.bf16 %v1899, %v1898
    %v1957 = vpack.c.bf16 %v1901, %v1900
    %v1958 = vpack.c.bf16 %v1903, %v1902
    %v1959 = vpack.c.bf16 %v1905, %v1904
    %v1960 = vpack.c.bf16 %v1907, %v1906
    %v1961 = vpack.c.bf16 %v1909, %v1908
    %v1962 = vpack.c.bf16 %v1911, %v1910
    %v1963 = vpack.c.bf16 %v1913, %v1912
    %v1964 = vpack.c.bf16 %v1915, %v1914
    %v1965 = vpack.c.bf16 %v1917, %v1916
    %v1966 = vpack.c.bf16 %v1919, %v1918
    %v1967 = vpack.c.bf16 %v1921, %v1920
    %v1968 = vpack.c.bf16 %v1923, %v1922
    %v1969 = vpack.c.bf16 %v1925, %v1924
    %v1970 = vpack.c.bf16 %v1927, %v1926
    %v1971 = vpack.c.bf16 %v1929, %v1928
    %v1972 = vpack.c.bf16 %v1931, %v1930
    %v1973 = vpack.c.bf16 %v1933, %v1932
    %v1974 = vpack.c.bf16 %v1935, %v1934
    %v1975 = vpack.c.bf16 %v1937, %v1936
    %v1976 = vpack.c.bf16 %v1939, %v1938
    %v1977 = vpack.c.bf16 %v1941, %v1940
    %v1978 = vpack.c.bf16 %v1943, %v1942
    %v1979 = vpack.c.bf16 %v1945, %v1944
    %v1980 = vpack.c.bf16 %v1947, %v1946
    %v1981 = vpack.c.bf16 %v1949, %v1948
    %v1982 = vld [vmem:[%s3] sm:$0xf]
    %v1983 = vld [vmem:[%s3 + $0x4] sm:$0xf]
    %v1984 = vld [vmem:[%s3 + $0x8] sm:$0xf]
    %v1985 = vld [vmem:[%s3 + $0xc] sm:$0xf]
    %v1986 = vld [vmem:[%s3 + $0x10] sm:$0xf]
    %v1987 = vld [vmem:[%s3 + $0x14] sm:$0xf]
    %v1988 = vld [vmem:[%s3 + $0x18] sm:$0xf]
    %v1989 = vld [vmem:[%s3 + $0x1c] sm:$0xf]
    %v1990 = vld [vmem:[%s3 + $0x20] sm:$0xf]
    %v1991 = vld [vmem:[%s3 + $0x24] sm:$0xf]
    %v1992 = vld [vmem:[%s3 + $0x28] sm:$0xf]
    %v1993 = vld [vmem:[%s3 + $0x2c] sm:$0xf]
    %v1994 = vld [vmem:[%s3 + $0x30] sm:$0xf]
    %v1995 = vld [vmem:[%s3 + $0x34] sm:$0xf]
    %v1996 = vld [vmem:[%s3 + $0x38] sm:$0xf]
    %v1997 = vld [vmem:[%s3 + $0x3c] sm:$0xf]
    %v2014 = vunpack.c.l.b16 %v1982
    %v2015 = vunpack.c.l.b16 %v1983
    %v2016 = vunpack.c.l.b16 %v1984
    %v2017 = vunpack.c.l.b16 %v1985
    %v2018 = vunpack.c.l.b16 %v1986
    %v2019 = vunpack.c.l.b16 %v1987
    %v2020 = vunpack.c.l.b16 %v1988
    %v2021 = vunpack.c.l.b16 %v1989
    %v2022 = vunpack.c.l.b16 %v1990
    %v2023 = vunpack.c.l.b16 %v1991
    %v2024 = vunpack.c.l.b16 %v1992
    %v2025 = vunpack.c.l.b16 %v1993
    %v2026 = vunpack.c.l.b16 %v1994
    %v2027 = vunpack.c.l.b16 %v1995
    %v2028 = vunpack.c.l.b16 %v1996
    %v2029 = vunpack.c.l.b16 %v1997
    %v2030 = vpack.c.b16 %v2015, %v2014
    %v2031 = vpack.c.b16 %v2017, %v2016
    %v2032 = vpack.c.b16 %v2019, %v2018
    %v2033 = vpack.c.b16 %v2021, %v2020
    %v2034 = vpack.c.b16 %v2023, %v2022
    %v2035 = vpack.c.b16 %v2025, %v2024
    %v2036 = vpack.c.b16 %v2027, %v2026
    %v2037 = vpack.c.b16 %v2029, %v2028
    %2046 = vmatpush.bf16.msra.mxu0 %v2037
    %2047 = vmatpush.bf16.msra.mxu0 %v2036
    %2048 = vmatpush.bf16.msra.mxu0 %v2035
    %2049 = vmatpush.bf16.msra.mxu0 %v2034
    %2050 = vmatpush.bf16.msra.mxu0 %v2033
    %2051 = vmatpush.bf16.msra.mxu0 %v2032
    %2052 = vmatpush.bf16.msra.mxu0 %v2031
    %2053 = vmatpush.bf16.msra.mxu0 %v2030
    %2054 = vmatmul.bf16.gmra.mxu0 %v1950
    %v2055 = vpop.f32.mrf.mxu0
    %v2056 = vadd.f32 0.0, %v2055
    %v2057 = vpop.f32.mrf.mxu0
    %v2058 = vadd.f32 0.0, %v2057
    %2059 = vmatmul.bf16.gmra.mxu0 %v1951
    %v2060 = vpop.f32.mrf.mxu0
    %v2061 = vadd.f32 0.0, %v2060
    %v2062 = vpop.f32.mrf.mxu0
    %v2063 = vadd.f32 0.0, %v2062
    %2064 = vmatmul.bf16.gmra.mxu0 %v1952
    %v2065 = vpop.f32.mrf.mxu0
    %v2066 = vadd.f32 0.0, %v2065
    %v2067 = vpop.f32.mrf.mxu0
    %v2068 = vadd.f32 0.0, %v2067
    %2069 = vmatmul.bf16.gmra.mxu0 %v1953
    %v2070 = vpop.f32.mrf.mxu0
    %v2071 = vadd.f32 0.0, %v2070
    %v2072 = vpop.f32.mrf.mxu0
    %v2073 = vadd.f32 0.0, %v2072
    %2074 = vmatmul.bf16.gmra.mxu0 %v1954
    %v2075 = vpop.f32.mrf.mxu0
    %v2076 = vadd.f32 0.0, %v2075
    %v2077 = vpop.f32.mrf.mxu0
    %v2078 = vadd.f32 0.0, %v2077
    %2079 = vmatmul.bf16.gmra.mxu0 %v1955
    %v2080 = vpop.f32.mrf.mxu0
    %v2081 = vadd.f32 0.0, %v2080
    %v2082 = vpop.f32.mrf.mxu0
    %v2083 = vadd.f32 0.0, %v2082
    %2084 = vmatmul.bf16.gmra.mxu0 %v1956
    %v2085 = vpop.f32.mrf.mxu0
    %v2086 = vadd.f32 0.0, %v2085
    %v2087 = vpop.f32.mrf.mxu0
    %v2088 = vadd.f32 0.0, %v2087
    %2089 = vmatmul.bf16.gmra.mxu0 %v1957
    %v2090 = vpop.f32.mrf.mxu0
    %v2091 = vadd.f32 0.0, %v2090
    %v2092 = vpop.f32.mrf.mxu0
    %v2093 = vadd.f32 0.0, %v2092
    %2094 = vmatmul.bf16.gmra.mxu0 %v1958
    %v2095 = vpop.f32.mrf.mxu0
    %v2096 = vadd.f32 0.0, %v2095
    %v2097 = vpop.f32.mrf.mxu0
    %v2098 = vadd.f32 0.0, %v2097
    %2099 = vmatmul.bf16.gmra.mxu0 %v1959
    %v2100 = vpop.f32.mrf.mxu0
    %v2101 = vadd.f32 0.0, %v2100
    %v2102 = vpop.f32.mrf.mxu0
    %v2103 = vadd.f32 0.0, %v2102
    %2104 = vmatmul.bf16.gmra.mxu0 %v1960
    %v2105 = vpop.f32.mrf.mxu0
    %v2106 = vadd.f32 0.0, %v2105
    %v2107 = vpop.f32.mrf.mxu0
    %v2108 = vadd.f32 0.0, %v2107
    %2109 = vmatmul.bf16.gmra.mxu0 %v1961
    %v2110 = vpop.f32.mrf.mxu0
    %v2111 = vadd.f32 0.0, %v2110
    %v2112 = vpop.f32.mrf.mxu0
    %v2113 = vadd.f32 0.0, %v2112
    %2114 = vmatmul.bf16.gmra.mxu0 %v1962
    %v2115 = vpop.f32.mrf.mxu0
    %v2116 = vadd.f32 0.0, %v2115
    %v2117 = vpop.f32.mrf.mxu0
    %v2118 = vadd.f32 0.0, %v2117
    %2119 = vmatmul.bf16.gmra.mxu0 %v1963
    %v2120 = vpop.f32.mrf.mxu0
    %v2121 = vadd.f32 0.0, %v2120
    %v2122 = vpop.f32.mrf.mxu0
    %v2123 = vadd.f32 0.0, %v2122
    %2124 = vmatmul.bf16.gmra.mxu0 %v1964
    %v2125 = vpop.f32.mrf.mxu0
    %v2126 = vadd.f32 0.0, %v2125
    %v2127 = vpop.f32.mrf.mxu0
    %v2128 = vadd.f32 0.0, %v2127
    %2129 = vmatmul.bf16.gmra.mxu0 %v1965
    %v2130 = vpop.f32.mrf.mxu0
    %v2131 = vadd.f32 0.0, %v2130
    %v2132 = vpop.f32.mrf.mxu0
    %v2133 = vadd.f32 0.0, %v2132
    %2134 = vmatmul.bf16.gmra.mxu0 %v1966
    %v2135 = vpop.f32.mrf.mxu0
    %v2136 = vadd.f32 0.0, %v2135
    %v2137 = vpop.f32.mrf.mxu0
    %v2138 = vadd.f32 0.0, %v2137
    %2139 = vmatmul.bf16.gmra.mxu0 %v1967
    %v2140 = vpop.f32.mrf.mxu0
    %v2141 = vadd.f32 0.0, %v2140
    %v2142 = vpop.f32.mrf.mxu0
    %v2143 = vadd.f32 0.0, %v2142
    %2144 = vmatmul.bf16.gmra.mxu0 %v1968
    %v2145 = vpop.f32.mrf.mxu0
    %v2146 = vadd.f32 0.0, %v2145
    %v2147 = vpop.f32.mrf.mxu0
    %v2148 = vadd.f32 0.0, %v2147
    %2149 = vmatmul.bf16.gmra.mxu0 %v1969
    %v2150 = vpop.f32.mrf.mxu0
    %v2151 = vadd.f32 0.0, %v2150
    %v2152 = vpop.f32.mrf.mxu0
    %v2153 = vadd.f32 0.0, %v2152
    %2154 = vmatmul.bf16.gmra.mxu0 %v1970
    %v2155 = vpop.f32.mrf.mxu0
    %v2156 = vadd.f32 0.0, %v2155
    %v2157 = vpop.f32.mrf.mxu0
    %v2158 = vadd.f32 0.0, %v2157
    %2159 = vmatmul.bf16.gmra.mxu0 %v1971
    %v2160 = vpop.f32.mrf.mxu0
    %v2161 = vadd.f32 0.0, %v2160
    %v2162 = vpop.f32.mrf.mxu0
    %v2163 = vadd.f32 0.0, %v2162
    %2164 = vmatmul.bf16.gmra.mxu0 %v1972
    %v2165 = vpop.f32.mrf.mxu0
    %v2166 = vadd.f32 0.0, %v2165
    %v2167 = vpop.f32.mrf.mxu0
    %v2168 = vadd.f32 0.0, %v2167
    %2169 = vmatmul.bf16.gmra.mxu0 %v1973
    %v2170 = vpop.f32.mrf.mxu0
    %v2171 = vadd.f32 0.0, %v2170
    %v2172 = vpop.f32.mrf.mxu0
    %v2173 = vadd.f32 0.0, %v2172
    %2174 = vmatmul.bf16.gmra.mxu0 %v1974
    %v2175 = vpop.f32.mrf.mxu0
    %v2176 = vadd.f32 0.0, %v2175
    %v2177 = vpop.f32.mrf.mxu0
    %v2178 = vadd.f32 0.0, %v2177
    %2179 = vmatmul.bf16.gmra.mxu0 %v1975
    %v2180 = vpop.f32.mrf.mxu0
    %v2181 = vadd.f32 0.0, %v2180
    %v2182 = vpop.f32.mrf.mxu0
    %v2183 = vadd.f32 0.0, %v2182
    %2184 = vmatmul.bf16.gmra.mxu0 %v1976
    %v2185 = vpop.f32.mrf.mxu0
    %v2186 = vadd.f32 0.0, %v2185
    %v2187 = vpop.f32.mrf.mxu0
    %v2188 = vadd.f32 0.0, %v2187
    %2189 = vmatmul.bf16.gmra.mxu0 %v1977
    %v2190 = vpop.f32.mrf.mxu0
    %v2191 = vadd.f32 0.0, %v2190
    %v2192 = vpop.f32.mrf.mxu0
    %v2193 = vadd.f32 0.0, %v2192
    %2194 = vmatmul.bf16.gmra.mxu0 %v1978
    %v2195 = vpop.f32.mrf.mxu0
    %v2196 = vadd.f32 0.0, %v2195
    %v2197 = vpop.f32.mrf.mxu0
    %v2198 = vadd.f32 0.0, %v2197
    %2199 = vmatmul.bf16.gmra.mxu0 %v1979
    %v2200 = vpop.f32.mrf.mxu0
    %v2201 = vadd.f32 0.0, %v2200
    %v2202 = vpop.f32.mrf.mxu0
    %v2203 = vadd.f32 0.0, %v2202
    %2204 = vmatmul.bf16.gmra.mxu0 %v1980
    %v2205 = vpop.f32.mrf.mxu0
    %v2206 = vadd.f32 0.0, %v2205
    %v2207 = vpop.f32.mrf.mxu0
    %v2208 = vadd.f32 0.0, %v2207
    %2209 = vmatmul.bf16.gmra.mxu0 %v1981
    %v2210 = vpop.f32.mrf.mxu0
    %v2211 = vadd.f32 0.0, %v2210
    %v2212 = vpop.f32.mrf.mxu0
    %v2213 = vadd.f32 0.0, %v2212
    %2214 = vdwg.mxu0
    %v2215 = vadd.f32 %v2056, %v2058
    %v2216 = vadd.f32 %v2215, %v2061
    %v2217 = vadd.f32 %v2216, %v2063
    %v2218 = vadd.f32 %v2217, %v2066
    %v2219 = vadd.f32 %v2218, %v2068
    %v2220 = vadd.f32 %v2219, %v2071
    %v2221 = vadd.f32 %v2220, %v2073
    %v2222 = vadd.f32 %v2221, %v2076
    %v2223 = vadd.f32 %v2222, %v2078
    %v2224 = vadd.f32 %v2223, %v2081
    %v2225 = vadd.f32 %v2224, %v2083
    %v2226 = vadd.f32 %v2225, %v2086
    %v2227 = vadd.f32 %v2226, %v2088
    %v2228 = vadd.f32 %v2227, %v2091
    %v2229 = vadd.f32 %v2228, %v2093
    %v2230 = vadd.f32 %v2229, %v2096
    %v2231 = vadd.f32 %v2230, %v2098
    %v2232 = vadd.f32 %v2231, %v2101
    %v2233 = vadd.f32 %v2232, %v2103
    %v2234 = vadd.f32 %v2233, %v2106
    %v2235 = vadd.f32 %v2234, %v2108
    %v2236 = vadd.f32 %v2235, %v2111
    %v2237 = vadd.f32 %v2236, %v2113
    %v2238 = vadd.f32 %v2237, %v2116
    %v2239 = vadd.f32 %v2238, %v2118
    %v2240 = vadd.f32 %v2239, %v2121
    %v2241 = vadd.f32 %v2240, %v2123
    %v2242 = vadd.f32 %v2241, %v2126
    %v2243 = vadd.f32 %v2242, %v2128
    %v2244 = vadd.f32 %v2243, %v2131
    %v2245 = vadd.f32 %v2244, %v2133
    %v2246 = vadd.f32 %v2245, %v2136
    %v2247 = vadd.f32 %v2246, %v2138
    %v2248 = vadd.f32 %v2247, %v2141
    %v2249 = vadd.f32 %v2248, %v2143
    %v2250 = vadd.f32 %v2249, %v2146
    %v2251 = vadd.f32 %v2250, %v2148
    %v2252 = vadd.f32 %v2251, %v2151
    %v2253 = vadd.f32 %v2252, %v2153
    %v2254 = vadd.f32 %v2253, %v2156
    %v2255 = vadd.f32 %v2254, %v2158
    %v2256 = vadd.f32 %v2255, %v2161
    %v2257 = vadd.f32 %v2256, %v2163
    %v2258 = vadd.f32 %v2257, %v2166
    %v2259 = vadd.f32 %v2258, %v2168
    %v2260 = vadd.f32 %v2259, %v2171
    %v2261 = vadd.f32 %v2260, %v2173
    %v2262 = vadd.f32 %v2261, %v2176
    %v2263 = vadd.f32 %v2262, %v2178
    %v2264 = vadd.f32 %v2263, %v2181
    %v2265 = vadd.f32 %v2264, %v2183
    %v2266 = vadd.f32 %v2265, %v2186
    %v2267 = vadd.f32 %v2266, %v2188
    %v2268 = vadd.f32 %v2267, %v2191
    %v2269 = vadd.f32 %v2268, %v2193
    %v2270 = vadd.f32 %v2269, %v2196
    %v2271 = vadd.f32 %v2270, %v2198
    %v2272 = vadd.f32 %v2271, %v2201
    %v2273 = vadd.f32 %v2272, %v2203
    %v2274 = vadd.f32 %v2273, %v2206
    %v2275 = vadd.f32 %v2274, %v2208
    %v2276 = vadd.f32 %v2275, %v2211
    %v2277 = vadd.f32 %v2276, %v2213
    %v2278 = vrot.slane %v2277, 4
    %v2279 = vadd.f32 %v2277, %v2278
    %v2280 = vrot.slane %v2279, 2
    %v2281 = vadd.f32 %v2279, %v2280
    %v2282 = vrot.slane %v2281, 1
    %v2283 = vadd.f32 %v2281, %v2282
    %2284 = vst [vmem:[#allocation2] sm:$0x1] %v2283
    %v2285 = vmul.f32 %v2056, %v2056
    %v2286 = vmul.f32 %v2058, %v2058
    %v2287 = vmul.f32 %v2061, %v2061
    %v2288 = vmul.f32 %v2063, %v2063
    %v2289 = vmul.f32 %v2066, %v2066
    %v2290 = vmul.f32 %v2068, %v2068
    %v2291 = vmul.f32 %v2071, %v2071
    %v2292 = vmul.f32 %v2073, %v2073
    %v2293 = vmul.f32 %v2076, %v2076
    %v2294 = vmul.f32 %v2078, %v2078
    %v2295 = vmul.f32 %v2081, %v2081
    %v2296 = vmul.f32 %v2083, %v2083
    %v2297 = vmul.f32 %v2086, %v2086
    %v2298 = vmul.f32 %v2088, %v2088
    %v2299 = vmul.f32 %v2091, %v2091
    %v2300 = vmul.f32 %v2093, %v2093
    %v2301 = vmul.f32 %v2096, %v2096
    %v2302 = vmul.f32 %v2098, %v2098
    %v2303 = vmul.f32 %v2101, %v2101
    %v2304 = vmul.f32 %v2103, %v2103
    %v2305 = vmul.f32 %v2106, %v2106
    %v2306 = vmul.f32 %v2108, %v2108
    %v2307 = vmul.f32 %v2111, %v2111
    %v2308 = vmul.f32 %v2113, %v2113
    %v2309 = vmul.f32 %v2116, %v2116
    %v2310 = vmul.f32 %v2118, %v2118
    %v2311 = vmul.f32 %v2121, %v2121
    %v2312 = vmul.f32 %v2123, %v2123
    %v2313 = vmul.f32 %v2126, %v2126
    %v2314 = vmul.f32 %v2128, %v2128
    %v2315 = vmul.f32 %v2131, %v2131
    %v2316 = vmul.f32 %v2133, %v2133
    %v2317 = vmul.f32 %v2136, %v2136
    %v2318 = vmul.f32 %v2138, %v2138
    %v2319 = vmul.f32 %v2141, %v2141
    %v2320 = vmul.f32 %v2143, %v2143
    %v2321 = vmul.f32 %v2146, %v2146
    %v2322 = vmul.f32 %v2148, %v2148
    %v2323 = vmul.f32 %v2151, %v2151
    %v2324 = vmul.f32 %v2153, %v2153
    %v2325 = vmul.f32 %v2156, %v2156
    %v2326 = vmul.f32 %v2158, %v2158
    %v2327 = vmul.f32 %v2161, %v2161
    %v2328 = vmul.f32 %v2163, %v2163
    %v2329 = vmul.f32 %v2166, %v2166
    %v2330 = vmul.f32 %v2168, %v2168
    %v2331 = vmul.f32 %v2171, %v2171
    %v2332 = vmul.f32 %v2173, %v2173
    %v2333 = vmul.f32 %v2176, %v2176
    %v2334 = vmul.f32 %v2178, %v2178
    %v2335 = vmul.f32 %v2181, %v2181
    %v2336 = vmul.f32 %v2183, %v2183
    %v2337 = vmul.f32 %v2186, %v2186
    %v2338 = vmul.f32 %v2188, %v2188
    %v2339 = vmul.f32 %v2191, %v2191
    %v2340 = vmul.f32 %v2193, %v2193
    %v2341 = vmul.f32 %v2196, %v2196
    %v2342 = vmul.f32 %v2198, %v2198
    %v2343 = vmul.f32 %v2201, %v2201
    %v2344 = vmul.f32 %v2203, %v2203
    %v2345 = vmul.f32 %v2206, %v2206
    %v2346 = vmul.f32 %v2208, %v2208
    %v2347 = vmul.f32 %v2211, %v2211
    %v2348 = vmul.f32 %v2213, %v2213
    %v2349 = vadd.f32 %v2285, %v2286
    %v2350 = vadd.f32 %v2349, %v2287
    %v2351 = vadd.f32 %v2350, %v2288
    %v2352 = vadd.f32 %v2351, %v2289
    %v2353 = vadd.f32 %v2352, %v2290
    %v2354 = vadd.f32 %v2353, %v2291
    %v2355 = vadd.f32 %v2354, %v2292
    %v2356 = vadd.f32 %v2355, %v2293
    %v2357 = vadd.f32 %v2356, %v2294
    %v2358 = vadd.f32 %v2357, %v2295
    %v2359 = vadd.f32 %v2358, %v2296
    %v2360 = vadd.f32 %v2359, %v2297
    %v2361 = vadd.f32 %v2360, %v2298
    %v2362 = vadd.f32 %v2361, %v2299
    %v2363 = vadd.f32 %v2362, %v2300
    %v2364 = vadd.f32 %v2363, %v2301
    %v2365 = vadd.f32 %v2364, %v2302
    %v2366 = vadd.f32 %v2365, %v2303
    %v2367 = vadd.f32 %v2366, %v2304
    %v2368 = vadd.f32 %v2367, %v2305
    %v2369 = vadd.f32 %v2368, %v2306
    %v2370 = vadd.f32 %v2369, %v2307
    %v2371 = vadd.f32 %v2370, %v2308
    %v2372 = vadd.f32 %v2371, %v2309
    %v2373 = vadd.f32 %v2372, %v2310
    %v2374 = vadd.f32 %v2373, %v2311
    %v2375 = vadd.f32 %v2374, %v2312
    %v2376 = vadd.f32 %v2375, %v2313
    %v2377 = vadd.f32 %v2376, %v2314
    %v2378 = vadd.f32 %v2377, %v2315
    %v2379 = vadd.f32 %v2378, %v2316
    %v2380 = vadd.f32 %v2379, %v2317
    %v2381 = vadd.f32 %v2380, %v2318
    %v2382 = vadd.f32 %v2381, %v2319
    %v2383 = vadd.f32 %v2382, %v2320
    %v2384 = vadd.f32 %v2383, %v2321
    %v2385 = vadd.f32 %v2384, %v2322
    %v2386 = vadd.f32 %v2385, %v2323
    %v2387 = vadd.f32 %v2386, %v2324
    %v2388 = vadd.f32 %v2387, %v2325
    %v2389 = vadd.f32 %v2388, %v2326
    %v2390 = vadd.f32 %v2389, %v2327
    %v2391 = vadd.f32 %v2390, %v2328
    %v2392 = vadd.f32 %v2391, %v2329
    %v2393 = vadd.f32 %v2392, %v2330
    %v2394 = vadd.f32 %v2393, %v2331
    %v2395 = vadd.f32 %v2394, %v2332
    %v2396 = vadd.f32 %v2395, %v2333
    %v2397 = vadd.f32 %v2396, %v2334
    %v2398 = vadd.f32 %v2397, %v2335
    %v2399 = vadd.f32 %v2398, %v2336
    %v2400 = vadd.f32 %v2399, %v2337
    %v2401 = vadd.f32 %v2400, %v2338
    %v2402 = vadd.f32 %v2401, %v2339
    %v2403 = vadd.f32 %v2402, %v2340
    %v2404 = vadd.f32 %v2403, %v2341
    %v2405 = vadd.f32 %v2404, %v2342
    %v2406 = vadd.f32 %v2405, %v2343
    %v2407 = vadd.f32 %v2406, %v2344
    %v2408 = vadd.f32 %v2407, %v2345
    %v2409 = vadd.f32 %v2408, %v2346
    %v2410 = vadd.f32 %v2409, %v2347
    %v2411 = vadd.f32 %v2410, %v2348
    %v2412 = vrot.slane %v2411, 4
    %v2413 = vadd.f32 %v2411, %v2412
    %v2414 = vrot.slane %v2413, 2
    %v2415 = vadd.f32 %v2413, %v2414
    %v2416 = vrot.slane %v2415, 1
    %v2417 = vadd.f32 %v2415, %v2416
    %2418 = vst [vmem:[#allocation2 + $0x1] sm:$0x1] %v2417
    // Predicated region
    $region18: #{tpu_custom_call.1} parent=1 // pred_check
      _
    $region19: #{tpu_custom_call.1} parent=1 // pred_check_branch
      %2420 = sbr.rel (0) target = $region21
    $region20: #{tpu_custom_call.1} parent=1 // pred_region
      %2422 = vsyncadd [#allocation3], 0
      %s2424 = sshll.u32 [#allocation2], 4
      %s2425 = int_to_ptr.vmem [resolvable:$true] %s2424
      %s2426 = sshll.u32 %s4, 4
      %s2427 = int_to_ptr.hbm [resolvable:$true] %s2426
      %2429 = dma.vmem_to_hbm [thread:$0]  %s2425, 32, %s2427, [#allocation3]
    $region21: #{tpu_custom_call.1} parent=1 // pred_fallthru
      _
    // Predicated region
    $region22: #{tpu_custom_call.1} parent=1 // pred_check
      _
    $region23: #{tpu_custom_call.1} parent=1 // pred_check_branch
      %2431 = sbr.rel (0) target = $region25
    $region24: #{tpu_custom_call.1} parent=1 // pred_region
      %2433 = dma.done [#allocation3], 32
    $region25: #{tpu_custom_call.1} parent=1 // pred_fallthru
      _
    %2434 = vsyncpa [#allocation3], 1

</llo_original>
